<compile_context>
chip_gen: v7x
topology: tpu7x:2x2x1
jax: 0.10.0
libtpu: 0.0.40
codegen_flags: <defaults>
</compile_context>

<pallas_src>
import functools

import jax
import jax.numpy as jnp
from jax import lax
from jax.experimental import pallas as pl
from jax.experimental.pallas import tpu as pltpu


# ----------------------------- helpers --------------------------------------

def _tap_aux(h, w):
    """Static lane-roll amounts + validity masks for a 3x3 SAME conv on an
    image flattened to (C, H*W) with H*W on the lane axis."""
    hw = h * w
    h_idx = jnp.arange(hw, dtype=jnp.int32) // w
    w_idx = jnp.arange(hw, dtype=jnp.int32) % w
    masks, shifts = [], []
    for dy in range(3):
        for dx in range(3):
            hh = h_idx + (dy - 1)
            ww = w_idx + (dx - 1)
            valid = (hh >= 0) & (hh < h) & (ww >= 0) & (ww < w)
            masks.append(valid.astype(jnp.float32).reshape(1, hw))
            # shifted[q] = x[q + s] with s = (dy-1)*W + (dx-1)  ->  np.roll by -s
            shifts.append((-((dy - 1) * w + (dx - 1))) % hw)
    return jnp.stack(masks, axis=0), tuple(shifts)   # (9, 1, HW), 9 python ints


# ------------------------------ fused kernel ---------------------------------

def _fused_detector_kernel(x_ref, m_ref, w1_ref, b1_ref, w2_ref, b2_ref,
                           wh_ref, bh_ref, o_ref, *, shifts):
    # One grid step == one image, layout (C, H*W): channels on sublanes,
    # flattened spatial on lanes (lane-dense loads and stores, no transposes).

    # 1) Normalize.forward: (image - 0.5) * 2   (free VPU work, fused)
    xn = (x_ref[0] - 0.5) * 2.0                                   # (Cin_p, HW)

    def conv3x3_taps(x):
        # Build the 9 shifted taps with XLU lane-rolls + zero-pad masks and
        # stack along sublanes -> one K = 9*C matmul instead of 9 tiny-K dots.
        taps = []
        for t in range(9):
            if shifts[t] == 0:
                taps.append(x)                 # center tap: no shift, all valid
            else:
                taps.append(m_ref[t] * pltpu.roll(x, shifts[t], axis=1))
        return jnp.concatenate(taps, axis=0)   # (9*C, HW)

    # 2) backbone: conv3x3 + bias + ReLU, twice (weights are (Cout, 9*Cin))
    f1 = jnp.dot(w1_ref[...], conv3x3_taps(xn),
                 preferred_element_type=jnp.float32) + b1_ref[...]
    f1 = jnp.maximum(f1, 0.0)                                     # (C1, HW)
    f2 = jnp.dot(w2_ref[...], conv3x3_taps(f1),
                 preferred_element_type=jnp.float32) + b2_ref[...]
    f2 = jnp.maximum(f2, 0.0)                                     # (C2, HW)

    # 3) head: 1x1 conv fused as epilogue; stored lane-dense (last dim = HW),
    #    already in NCHW channel-major order.
    o_ref[0] = jnp.dot(wh_ref[...], f2,
                       preferred_element_type=jnp.float32) + bh_ref[...]


# ------------------------------ Detector -------------------------------------

class PallasDetector:
    """Synthetic concrete Detector: norm -> backbone -> head, one fused kernel."""

    def __init__(self, key, in_ch=4, feat1=32, feat2=32, num_maps=8):
        assert feat1 % 8 == 0 and feat2 % 8 == 0 and num_maps % 8 == 0
        k1, k2, k3, k4, k5, k6 = jax.random.split(key, 6)
        s = 0.1
        self.in_ch, self.feat1, self.feat2, self.num_maps = in_ch, feat1, feat2, num_maps
        # backbone conv weights in HWIO
        self.w1 = jax.random.normal(k1, (3, 3, in_ch, feat1), jnp.float32) * s
        self.b1 = jax.random.normal(k2, (feat1,), jnp.float32) * s
        self.w2 = jax.random.normal(k3, (3, 3, feat1, feat2), jnp.float32) * s
        self.b2 = jax.random.normal(k4, (feat2,), jnp.float32) * s
        # head: 1x1 conv (channel projection)
        self.wh = jax.random.normal(k5, (feat2, num_maps), jnp.float32) * s
        self.bh = jax.random.normal(k6, (num_maps,), jnp.float32) * s

    def __call__(self, image_nchw):
        b, c, h, w = image_nchw.shape
        hw = h * w
        cin_p = ((c + 7) // 8) * 8            # pad input channels to sublane mult.

        # --- wrapper-side layout plumbing (tiny, weight-side or metadata-only) ---
        x = image_nchw.reshape(b, c, hw)                     # NCHW -> (B, C, HW), free
        if cin_p != c:
            x = jnp.pad(x, ((0, 0), (0, cin_p - c), (0, 0)))  # phantom channels (zero wts)

        masks, shifts = _tap_aux(h, w)

        # Flatten conv weights to (Cout, 9*Cin), tap-major / cin-minor, matching
        # the sublane-stacked tap matrix built in the kernel.
        w1f = jnp.pad(self.w1, ((0, 0), (0, 0), (0, cin_p - c), (0, 0)))
        w1f = w1f.reshape(9, cin_p, self.feat1).transpose(2, 0, 1).reshape(
            self.feat1, 9 * cin_p)
        w2f = self.w2.reshape(9, self.feat1, self.feat2).transpose(2, 0, 1).reshape(
            self.feat2, 9 * self.feat1)
        whf = self.wh.T                                      # (num_maps, feat2)
        b1c = self.b1.reshape(self.feat1, 1)
        b2c = self.b2.reshape(self.feat2, 1)
        bhc = self.bh.reshape(self.num_maps, 1)

        kernel = functools.partial(_fused_detector_kernel, shifts=shifts)

        out = pl.pallas_call(
            kernel,
            out_shape=jax.ShapeDtypeStruct((b, self.num_maps, hw), jnp.float32),
            grid=(b,),
            in_specs=[
                pl.BlockSpec((1, cin_p, hw), lambda i: (i, 0, 0)),
                pl.BlockSpec((9, 1, hw), lambda i: (0, 0, 0)),
                pl.BlockSpec(w1f.shape, lambda i: (0, 0)),
                pl.BlockSpec(b1c.shape, lambda i: (0, 0)),
                pl.BlockSpec(w2f.shape, lambda i: (0, 0)),
                pl.BlockSpec(b2c.shape, lambda i: (0, 0)),
                pl.BlockSpec(whf.shape, lambda i: (0, 0)),
                pl.BlockSpec(bhc.shape, lambda i: (0, 0)),
            ],
            out_specs=pl.BlockSpec((1, self.num_maps, hw), lambda i: (i, 0, 0)),
            compiler_params=pltpu.CompilerParams(
                dimension_semantics=("parallel",)),
        )(x, masks, w1f, b1c, w2f, b2c, whf, bhc)

        # (B, num_maps, HW) is already channel-major -> free reshape to NCHW.
        return out.reshape(b, self.num_maps, h, w)


# ---------------------------- pure-JAX reference -----------------------------

def _ref_forward(det, image_nchw):
    dn = ('NCHW', 'HWIO', 'NCHW')
    x = (image_nchw - 0.5) * 2.0
    x = lax.conv_general_dilated(x, det.w1, (1, 1), 'SAME', dimension_numbers=dn)
    x = jax.nn.relu(x + det.b1[None, :, None, None])
    x = lax.conv_general_dilated(x, det.w2, (1, 1), 'SAME', dimension_numbers=dn)
    x = jax.nn.relu(x + det.b2[None, :, None, None])
    x = lax.conv_general_dilated(x, det.wh[None, None], (1, 1), 'SAME',
                                 dimension_numbers=dn)
    return x + det.bh[None, :, None, None]


if __name__ == "__main__":
    key = jax.random.PRNGKey(0)
    kimg, kparam = jax.random.split(key)

    # NCHW image, like the PyTorch module: batch=2, channels=4, spatial=16x16
    image = jax.random.uniform(kimg, (2, 4, 16, 16), dtype=jnp.float32)

    det = PallasDetector(kparam, in_ch=4, feat1=32, feat2=32, num_maps=8)

    out = jax.block_until_ready(det(image))
    ref = jax.block_until_ready(_ref_forward(det, image))

    assert out.shape == (2, 8, 16, 16), out.shape
    assert jnp.allclose(out, ref, rtol=2e-3, atol=2e-3), "mismatch vs reference"
    print("KERNEL_OK")
</pallas_src>

<mosaic_0001>
module attributes {stable_mosaic.version = 11 : i64} {
  func.func @_fused_detector_kernel(%arg0: i32, %arg1: memref<1x8x256xf32, #tpu.memory_space<vmem>>, %arg2: memref<9x1x256xf32, #tpu.memory_space<vmem>>, %arg3: memref<32x72xf32, #tpu.memory_space<vmem>>, %arg4: memref<32x1xf32, #tpu.memory_space<vmem>>, %arg5: memref<32x288xf32, #tpu.memory_space<vmem>>, %arg6: memref<32x1xf32, #tpu.memory_space<vmem>>, %arg7: memref<8x32xf32, #tpu.memory_space<vmem>>, %arg8: memref<8x1xf32, #tpu.memory_space<vmem>>, %arg9: memref<1x8x256xf32, #tpu.memory_space<vmem>>) attributes {dimension_semantics = [#tpu.dimension_semantics<parallel>], iteration_bounds = array<i64: 2>, scalar_prefetch = 0 : i64, scratch_operands = 0 : i64, tpu.core_type = #tpu.core_type<tc>, window_params = [{transform_indices = @transform_0, window_bounds = array<i64: 1, 8, 256>}, {pipeline_mode = #tpu.pipeline_mode<synchronous>, transform_indices = @transform_1, window_bounds = array<i64: 9, 1, 256>}, {pipeline_mode = #tpu.pipeline_mode<synchronous>, transform_indices = @transform_2, window_bounds = array<i64: 32, 72>}, {pipeline_mode = #tpu.pipeline_mode<synchronous>, transform_indices = @transform_3, window_bounds = array<i64: 32, 1>}, {pipeline_mode = #tpu.pipeline_mode<synchronous>, transform_indices = @transform_4, window_bounds = array<i64: 32, 288>}, {pipeline_mode = #tpu.pipeline_mode<synchronous>, transform_indices = @transform_5, window_bounds = array<i64: 32, 1>}, {pipeline_mode = #tpu.pipeline_mode<synchronous>, transform_indices = @transform_6, window_bounds = array<i64: 8, 32>}, {pipeline_mode = #tpu.pipeline_mode<synchronous>, transform_indices = @transform_7, window_bounds = array<i64: 8, 1>}, {transform_indices = @transform_8, window_bounds = array<i64: 1, 8, 256>}]} {
    %c0 = arith.constant 0 : index
    %c0_0 = arith.constant 0 : index
    %c0_1 = arith.constant 0 : index
    %0 = vector.load %arg1[%c0, %c0_0, %c0_1] : memref<1x8x256xf32, #tpu.memory_space<vmem>>, vector<1x8x256xf32>
    %1 = vector.shape_cast %0 : vector<1x8x256xf32> to vector<8x256xf32>
    %cst = arith.constant 5.000000e-01 : f32
    %2 = vector.broadcast %cst : f32 to vector<8x256xf32>
    %3 = arith.subf %1, %2 : vector<8x256xf32>
    %cst_2 = arith.constant 2.000000e+00 : f32
    %4 = vector.broadcast %cst_2 : f32 to vector<8x256xf32>
    %5 = arith.mulf %3, %4 : vector<8x256xf32>
    %c0_3 = arith.constant 0 : index
    %c0_4 = arith.constant 0 : index
    %6 = vector.load %arg3[%c0_3, %c0_4] : memref<32x72xf32, #tpu.memory_space<vmem>>, vector<32x72xf32>
    %c0_5 = arith.constant 0 : index
    %c0_6 = arith.constant 0 : index
    %c0_7 = arith.constant 0 : index
    %7 = vector.load %arg2[%c0_5, %c0_6, %c0_7] : memref<9x1x256xf32, #tpu.memory_space<vmem>>, vector<1x1x256xf32>
    %8 = vector.shape_cast %7 : vector<1x1x256xf32> to vector<1x256xf32>
    %c17_i32 = arith.constant 17 : i32
    %9 = tpu.dynamic_rotate %5 by %c17_i32 dim 1 : vector<8x256xf32>, i32 -> vector<8x256xf32>
    %10 = vector.broadcast %8 : vector<1x256xf32> to vector<8x256xf32>
    %11 = arith.mulf %10, %9 : vector<8x256xf32>
    %c1 = arith.constant 1 : index
    %c0_8 = arith.constant 0 : index
    %c0_9 = arith.constant 0 : index
    %12 = vector.load %arg2[%c1, %c0_8, %c0_9] : memref<9x1x256xf32, #tpu.memory_space<vmem>>, vector<1x1x256xf32>
    %13 = vector.shape_cast %12 : vector<1x1x256xf32> to vector<1x256xf32>
    %c16_i32 = arith.constant 16 : i32
    %14 = tpu.dynamic_rotate %5 by %c16_i32 dim 1 : vector<8x256xf32>, i32 -> vector<8x256xf32>
    %15 = vector.broadcast %13 : vector<1x256xf32> to vector<8x256xf32>
    %16 = arith.mulf %15, %14 : vector<8x256xf32>
    %c2 = arith.constant 2 : index
    %c0_10 = arith.constant 0 : index
    %c0_11 = arith.constant 0 : index
    %17 = vector.load %arg2[%c2, %c0_10, %c0_11] : memref<9x1x256xf32, #tpu.memory_space<vmem>>, vector<1x1x256xf32>
    %18 = vector.shape_cast %17 : vector<1x1x256xf32> to vector<1x256xf32>
    %c15_i32 = arith.constant 15 : i32
    %19 = tpu.dynamic_rotate %5 by %c15_i32 dim 1 : vector<8x256xf32>, i32 -> vector<8x256xf32>
    %20 = vector.broadcast %18 : vector<1x256xf32> to vector<8x256xf32>
    %21 = arith.mulf %20, %19 : vector<8x256xf32>
    %c3 = arith.constant 3 : index
    %c0_12 = arith.constant 0 : index
    %c0_13 = arith.constant 0 : index
    %22 = vector.load %arg2[%c3, %c0_12, %c0_13] : memref<9x1x256xf32, #tpu.memory_space<vmem>>, vector<1x1x256xf32>
    %23 = vector.shape_cast %22 : vector<1x1x256xf32> to vector<1x256xf32>
    %c1_i32 = arith.constant 1 : i32
    %24 = tpu.dynamic_rotate %5 by %c1_i32 dim 1 : vector<8x256xf32>, i32 -> vector<8x256xf32>
    %25 = vector.broadcast %23 : vector<1x256xf32> to vector<8x256xf32>
    %26 = arith.mulf %25, %24 : vector<8x256xf32>
    %c5 = arith.constant 5 : index
    %c0_14 = arith.constant 0 : index
    %c0_15 = arith.constant 0 : index
    %27 = vector.load %arg2[%c5, %c0_14, %c0_15] : memref<9x1x256xf32, #tpu.memory_space<vmem>>, vector<1x1x256xf32>
    %28 = vector.shape_cast %27 : vector<1x1x256xf32> to vector<1x256xf32>
    %c255_i32 = arith.constant 255 : i32
    %29 = tpu.dynamic_rotate %5 by %c255_i32 dim 1 : vector<8x256xf32>, i32 -> vector<8x256xf32>
    %30 = vector.broadcast %28 : vector<1x256xf32> to vector<8x256xf32>
    %31 = arith.mulf %30, %29 : vector<8x256xf32>
    %c6 = arith.constant 6 : index
    %c0_16 = arith.constant 0 : index
    %c0_17 = arith.constant 0 : index
    %32 = vector.load %arg2[%c6, %c0_16, %c0_17] : memref<9x1x256xf32, #tpu.memory_space<vmem>>, vector<1x1x256xf32>
    %33 = vector.shape_cast %32 : vector<1x1x256xf32> to vector<1x256xf32>
    %c241_i32 = arith.constant 241 : i32
    %34 = tpu.dynamic_rotate %5 by %c241_i32 dim 1 : vector<8x256xf32>, i32 -> vector<8x256xf32>
    %35 = vector.broadcast %33 : vector<1x256xf32> to vector<8x256xf32>
    %36 = arith.mulf %35, %34 : vector<8x256xf32>
    %c7 = arith.constant 7 : index
    %c0_18 = arith.constant 0 : index
    %c0_19 = arith.constant 0 : index
    %37 = vector.load %arg2[%c7, %c0_18, %c0_19] : memref<9x1x256xf32, #tpu.memory_space<vmem>>, vector<1x1x256xf32>
    %38 = vector.shape_cast %37 : vector<1x1x256xf32> to vector<1x256xf32>
    %c240_i32 = arith.constant 240 : i32
    %39 = tpu.dynamic_rotate %5 by %c240_i32 dim 1 : vector<8x256xf32>, i32 -> vector<8x256xf32>
    %40 = vector.broadcast %38 : vector<1x256xf32> to vector<8x256xf32>
    %41 = arith.mulf %40, %39 : vector<8x256xf32>
    %c8 = arith.constant 8 : index
    %c0_20 = arith.constant 0 : index
    %c0_21 = arith.constant 0 : index
    %42 = vector.load %arg2[%c8, %c0_20, %c0_21] : memref<9x1x256xf32, #tpu.memory_space<vmem>>, vector<1x1x256xf32>
    %43 = vector.shape_cast %42 : vector<1x1x256xf32> to vector<1x256xf32>
    %c239_i32 = arith.constant 239 : i32
    %44 = tpu.dynamic_rotate %5 by %c239_i32 dim 1 : vector<8x256xf32>, i32 -> vector<8x256xf32>
    %45 = vector.broadcast %43 : vector<1x256xf32> to vector<8x256xf32>
    %46 = arith.mulf %45, %44 : vector<8x256xf32>
    %47 = tpu.concatenate %11, %16, %21, %26, %5, %31, %36, %41, %46 in 0 : vector<8x256xf32>, vector<8x256xf32>, vector<8x256xf32>, vector<8x256xf32>, vector<8x256xf32>, vector<8x256xf32>, vector<8x256xf32>, vector<8x256xf32>, vector<8x256xf32> -> vector<72x256xf32>
    %cst_22 = arith.constant dense<0.000000e+00> : vector<32x256xf32>
    %48 = tpu.matmul %6, %47, %cst_22 {dimension_numbers = #tpu.dot_dimension_numbers<[1], [0], [0], [1], [0, 0, 1, 1], [], []>} : vector<32x72xf32>, vector<72x256xf32>, vector<32x256xf32> -> vector<32x256xf32>
    %c0_23 = arith.constant 0 : index
    %c0_24 = arith.constant 0 : index
    %49 = vector.load %arg4[%c0_23, %c0_24] : memref<32x1xf32, #tpu.memory_space<vmem>>, vector<32x1xf32>
    %50 = vector.broadcast %49 : vector<32x1xf32> to vector<32x256xf32>
    %51 = arith.addf %48, %50 : vector<32x256xf32>
    %cst_25 = arith.constant 0.000000e+00 : f32
    %52 = vector.broadcast %cst_25 : f32 to vector<32x256xf32>
    %53 = arith.maximumf %51, %52 : vector<32x256xf32>
    %c0_26 = arith.constant 0 : index
    %c0_27 = arith.constant 0 : index
    %54 = vector.load %arg5[%c0_26, %c0_27] : memref<32x288xf32, #tpu.memory_space<vmem>>, vector<32x288xf32>
    %c0_28 = arith.constant 0 : index
    %c0_29 = arith.constant 0 : index
    %c0_30 = arith.constant 0 : index
    %55 = vector.load %arg2[%c0_28, %c0_29, %c0_30] : memref<9x1x256xf32, #tpu.memory_space<vmem>>, vector<1x1x256xf32>
    %56 = vector.shape_cast %55 : vector<1x1x256xf32> to vector<1x256xf32>
    %c17_i32_31 = arith.constant 17 : i32
    %57 = tpu.dynamic_rotate %53 by %c17_i32_31 dim 1 : vector<32x256xf32>, i32 -> vector<32x256xf32>
    %58 = vector.broadcast %56 : vector<1x256xf32> to vector<32x256xf32>
    %59 = arith.mulf %58, %57 : vector<32x256xf32>
    %c1_32 = arith.constant 1 : index
    %c0_33 = arith.constant 0 : index
    %c0_34 = arith.constant 0 : index
    %60 = vector.load %arg2[%c1_32, %c0_33, %c0_34] : memref<9x1x256xf32, #tpu.memory_space<vmem>>, vector<1x1x256xf32>
    %61 = vector.shape_cast %60 : vector<1x1x256xf32> to vector<1x256xf32>
    %c16_i32_35 = arith.constant 16 : i32
    %62 = tpu.dynamic_rotate %53 by %c16_i32_35 dim 1 : vector<32x256xf32>, i32 -> vector<32x256xf32>
    %63 = vector.broadcast %61 : vector<1x256xf32> to vector<32x256xf32>
    %64 = arith.mulf %63, %62 : vector<32x256xf32>
    %c2_36 = arith.constant 2 : index
    %c0_37 = arith.constant 0 : index
    %c0_38 = arith.constant 0 : index
    %65 = vector.load %arg2[%c2_36, %c0_37, %c0_38] : memref<9x1x256xf32, #tpu.memory_space<vmem>>, vector<1x1x256xf32>
    %66 = vector.shape_cast %65 : vector<1x1x256xf32> to vector<1x256xf32>
    %c15_i32_39 = arith.constant 15 : i32
    %67 = tpu.dynamic_rotate %53 by %c15_i32_39 dim 1 : vector<32x256xf32>, i32 -> vector<32x256xf32>
    %68 = vector.broadcast %66 : vector<1x256xf32> to vector<32x256xf32>
    %69 = arith.mulf %68, %67 : vector<32x256xf32>
    %c3_40 = arith.constant 3 : index
    %c0_41 = arith.constant 0 : index
    %c0_42 = arith.constant 0 : index
    %70 = vector.load %arg2[%c3_40, %c0_41, %c0_42] : memref<9x1x256xf32, #tpu.memory_space<vmem>>, vector<1x1x256xf32>
    %71 = vector.shape_cast %70 : vector<1x1x256xf32> to vector<1x256xf32>
    %c1_i32_43 = arith.constant 1 : i32
    %72 = tpu.dynamic_rotate %53 by %c1_i32_43 dim 1 : vector<32x256xf32>, i32 -> vector<32x256xf32>
    %73 = vector.broadcast %71 : vector<1x256xf32> to vector<32x256xf32>
    %74 = arith.mulf %73, %72 : vector<32x256xf32>
    %c5_44 = arith.constant 5 : index
    %c0_45 = arith.constant 0 : index
    %c0_46 = arith.constant 0 : index
    %75 = vector.load %arg2[%c5_44, %c0_45, %c0_46] : memref<9x1x256xf32, #tpu.memory_space<vmem>>, vector<1x1x256xf32>
    %76 = vector.shape_cast %75 : vector<1x1x256xf32> to vector<1x256xf32>
    %c255_i32_47 = arith.constant 255 : i32
    %77 = tpu.dynamic_rotate %53 by %c255_i32_47 dim 1 : vector<32x256xf32>, i32 -> vector<32x256xf32>
    %78 = vector.broadcast %76 : vector<1x256xf32> to vector<32x256xf32>
    %79 = arith.mulf %78, %77 : vector<32x256xf32>
    %c6_48 = arith.constant 6 : index
    %c0_49 = arith.constant 0 : index
    %c0_50 = arith.constant 0 : index
    %80 = vector.load %arg2[%c6_48, %c0_49, %c0_50] : memref<9x1x256xf32, #tpu.memory_space<vmem>>, vector<1x1x256xf32>
    %81 = vector.shape_cast %80 : vector<1x1x256xf32> to vector<1x256xf32>
    %c241_i32_51 = arith.constant 241 : i32
    %82 = tpu.dynamic_rotate %53 by %c241_i32_51 dim 1 : vector<32x256xf32>, i32 -> vector<32x256xf32>
    %83 = vector.broadcast %81 : vector<1x256xf32> to vector<32x256xf32>
    %84 = arith.mulf %83, %82 : vector<32x256xf32>
    %c7_52 = arith.constant 7 : index
    %c0_53 = arith.constant 0 : index
    %c0_54 = arith.constant 0 : index
    %85 = vector.load %arg2[%c7_52, %c0_53, %c0_54] : memref<9x1x256xf32, #tpu.memory_space<vmem>>, vector<1x1x256xf32>
    %86 = vector.shape_cast %85 : vector<1x1x256xf32> to vector<1x256xf32>
    %c240_i32_55 = arith.constant 240 : i32
    %87 = tpu.dynamic_rotate %53 by %c240_i32_55 dim 1 : vector<32x256xf32>, i32 -> vector<32x256xf32>
    %88 = vector.broadcast %86 : vector<1x256xf32> to vector<32x256xf32>
    %89 = arith.mulf %88, %87 : vector<32x256xf32>
    %c8_56 = arith.constant 8 : index
    %c0_57 = arith.constant 0 : index
    %c0_58 = arith.constant 0 : index
    %90 = vector.load %arg2[%c8_56, %c0_57, %c0_58] : memref<9x1x256xf32, #tpu.memory_space<vmem>>, vector<1x1x256xf32>
    %91 = vector.shape_cast %90 : vector<1x1x256xf32> to vector<1x256xf32>
    %c239_i32_59 = arith.constant 239 : i32
    %92 = tpu.dynamic_rotate %53 by %c239_i32_59 dim 1 : vector<32x256xf32>, i32 -> vector<32x256xf32>
    %93 = vector.broadcast %91 : vector<1x256xf32> to vector<32x256xf32>
    %94 = arith.mulf %93, %92 : vector<32x256xf32>
    %95 = tpu.concatenate %59, %64, %69, %74, %53, %79, %84, %89, %94 in 0 : vector<32x256xf32>, vector<32x256xf32>, vector<32x256xf32>, vector<32x256xf32>, vector<32x256xf32>, vector<32x256xf32>, vector<32x256xf32>, vector<32x256xf32>, vector<32x256xf32> -> vector<288x256xf32>
    %cst_60 = arith.constant dense<0.000000e+00> : vector<32x256xf32>
    %96 = tpu.matmul %54, %95, %cst_60 {dimension_numbers = #tpu.dot_dimension_numbers<[1], [0], [0], [1], [0, 0, 1, 1], [], []>} : vector<32x288xf32>, vector<288x256xf32>, vector<32x256xf32> -> vector<32x256xf32>
    %c0_61 = arith.constant 0 : index
    %c0_62 = arith.constant 0 : index
    %97 = vector.load %arg6[%c0_61, %c0_62] : memref<32x1xf32, #tpu.memory_space<vmem>>, vector<32x1xf32>
    %98 = vector.broadcast %97 : vector<32x1xf32> to vector<32x256xf32>
    %99 = arith.addf %96, %98 : vector<32x256xf32>
    %cst_63 = arith.constant 0.000000e+00 : f32
    %100 = vector.broadcast %cst_63 : f32 to vector<32x256xf32>
    %101 = arith.maximumf %99, %100 : vector<32x256xf32>
    %c0_64 = arith.constant 0 : index
    %c0_65 = arith.constant 0 : index
    %102 = vector.load %arg7[%c0_64, %c0_65] : memref<8x32xf32, #tpu.memory_space<vmem>>, vector<8x32xf32>
    %cst_66 = arith.constant dense<0.000000e+00> : vector<8x256xf32>
    %103 = tpu.matmul %102, %101, %cst_66 {dimension_numbers = #tpu.dot_dimension_numbers<[1], [0], [0], [1], [0, 0, 1, 1], [], []>} : vector<8x32xf32>, vector<32x256xf32>, vector<8x256xf32> -> vector<8x256xf32>
    %c0_67 = arith.constant 0 : index
    %c0_68 = arith.constant 0 : index
    %104 = vector.load %arg8[%c0_67, %c0_68] : memref<8x1xf32, #tpu.memory_space<vmem>>, vector<8x1xf32>
    %105 = vector.broadcast %104 : vector<8x1xf32> to vector<8x256xf32>
    %106 = arith.addf %103, %105 : vector<8x256xf32>
    %c0_69 = arith.constant 0 : index
    %c0_70 = arith.constant 0 : index
    %c0_71 = arith.constant 0 : index
    %107 = vector.load %arg9[%c0_69, %c0_70, %c0_71] : memref<1x8x256xf32, #tpu.memory_space<vmem>>, vector<1x8x256xf32>
    %108 = vector.shape_cast %107 : vector<1x8x256xf32> to vector<8x256xf32>
    %109 = vector.shape_cast %106 : vector<8x256xf32> to vector<1x8x256xf32>
    tpu.vector_store %arg9[%c0_69, %c0_70, %c0_71], %109 {strides = array<i32>} : memref<1x8x256xf32, #tpu.memory_space<vmem>>, vector<1x8x256xf32>,
    return
  }
  func.func @transform_0(%arg0: i32) -> (i32, i32, i32) {
    %c0_i32 = arith.constant 0 : i32
    %c0_i32_0 = arith.constant 0 : i32
    %c0_i32_1 = arith.constant 0 : i32
    return %arg0, %c0_i32, %c0_i32_0 : i32, i32, i32
  }
  func.func @transform_1(%arg0: i32) -> (i32, i32, i32) {
    %c0_i32 = arith.constant 0 : i32
    %c0_i32_0 = arith.constant 0 : i32
    %c0_i32_1 = arith.constant 0 : i32
    %c0_i32_2 = arith.constant 0 : i32
    return %c0_i32, %c0_i32_0, %c0_i32_1 : i32, i32, i32
  }
  func.func @transform_2(%arg0: i32) -> (i32, i32) {
    %c0_i32 = arith.constant 0 : i32
    %c0_i32_0 = arith.constant 0 : i32
    %c0_i32_1 = arith.constant 0 : i32
    return %c0_i32, %c0_i32_0 : i32, i32
  }
  func.func @transform_3(%arg0: i32) -> (i32, i32) {
    %c0_i32 = arith.constant 0 : i32
    %c0_i32_0 = arith.constant 0 : i32
    %c0_i32_1 = arith.constant 0 : i32
    return %c0_i32, %c0_i32_0 : i32, i32
  }
  func.func @transform_4(%arg0: i32) -> (i32, i32) {
    %c0_i32 = arith.constant 0 : i32
    %c0_i32_0 = arith.constant 0 : i32
    %c0_i32_1 = arith.constant 0 : i32
    return %c0_i32, %c0_i32_0 : i32, i32
  }
  func.func @transform_5(%arg0: i32) -> (i32, i32) {
    %c0_i32 = arith.constant 0 : i32
    %c0_i32_0 = arith.constant 0 : i32
    %c0_i32_1 = arith.constant 0 : i32
    return %c0_i32, %c0_i32_0 : i32, i32
  }
  func.func @transform_6(%arg0: i32) -> (i32, i32) {
    %c0_i32 = arith.constant 0 : i32
    %c0_i32_0 = arith.constant 0 : i32
    %c0_i32_1 = arith.constant 0 : i32
    return %c0_i32, %c0_i32_0 : i32, i32
  }
  func.func @transform_7(%arg0: i32) -> (i32, i32) {
    %c0_i32 = arith.constant 0 : i32
    %c0_i32_0 = arith.constant 0 : i32
    %c0_i32_1 = arith.constant 0 : i32
    return %c0_i32, %c0_i32_0 : i32, i32
  }
  func.func @transform_8(%arg0: i32) -> (i32, i32, i32) {
    %c0_i32 = arith.constant 0 : i32
    %c0_i32_0 = arith.constant 0 : i32
    %c0_i32_1 = arith.constant 0 : i32
    return %arg0, %c0_i32, %c0_i32_0 : i32, i32, i32
  }
}

</mosaic_0001>

<llo_original>
// kernel: tpu_custom_call.1
$region0: #{tpu_custom_call.1}
  #allocation0 [shape = 'u32[]', space=smem, size = 0x4, offset = 0x4, fixed_abs, tag = 'smem constant byte address 0x4 - core index']
  #allocation1 [shape = 'u32[144,128]{1,0:T(1,128)}', space=vmem, size = 0x12000, scoped, tag = 'internal scratch']
  %s0 = inlined_call_operand.vmem [shape: f32[2,8,256], index: 0, kind: input, shape index: {}]
  %s1 = inlined_call_operand.hbm [shape: f32[9,1,256], index: 1, kind: input, shape index: {}]
  %s2 = inlined_call_operand.vmem [shape: f32[32,72], index: 2, kind: input, shape index: {}]
  %s3 = inlined_call_operand.vmem [shape: f32[32,1], index: 3, kind: input, shape index: {}]
  %s4 = inlined_call_operand.hbm [shape: f32[32,288], index: 4, kind: input, shape index: {}]
  %s5 = inlined_call_operand.vmem [shape: f32[32,1], index: 5, kind: input, shape index: {}]
  %s6 = inlined_call_operand.vmem [shape: f32[8,32], index: 6, kind: input, shape index: {}]
  %s7 = inlined_call_operand.vmem [shape: f32[8,1], index: 7, kind: input, shape index: {}]
  %s8 = inlined_call_operand.hbm [shape: f32[2,8,256], index: 8, kind: output, shape index: {}]
  %s9 = sld [smem:[#allocation0]]
  $region73: #{tpu_custom_call.1} parent=0
    _
  %s11 = ssub.s32 1, %s9
  %s12 = scalar_select 0, %s11, %s9
  $region1: #{tpu_custom_call.1} parent=0
    #allocation2 [shape = 'u8[9216]{0}', space=vmem, size = 0x2400, scoped, tag = 'input window, operand 1, single buffered']
    #allocation3 [shape = 's32[2]{0}', space=sflag, size = 0x8, scoped, tag = 'scoped memory for tpu_custom_call.1']
    #allocation4 [shape = 's32[2]{0}', space=sflag, size = 0x8, scoped, tag = 'scoped memory for tpu_custom_call.1']
    #allocation5 [shape = 'u8[49152]{0}', space=vmem, size = 0xc000, scoped, tag = 'input window, operand 4, single buffered']
    #allocation6 [shape = 's32[1]{0}', space=sflag, size = 0x4, scoped, tag = 'scoped memory for tpu_custom_call.1']
    #allocation7 [shape = 'u8[16384]{0}', space=vmem, size = 0x4000, scoped, tag = 'output window, operand 0']
    %13 = vsyncpa [#allocation3], 0
    %14 = vsyncpa [#allocation6], 0
    %15 = vsyncpa [#allocation4], 0
    %s16 = scalar_lea.sflag [#allocation4], 1
    %17 = vsyncpa %s16, 0
    loop: start=0, step=1, limit=4
    $region2: #{tpu_custom_call.1} parent=1 // loop_pre_header
      _
    $region3: #{tpu_custom_call.1} parent=1 // loop_header
      %s19 = sphi 0, %s23
      %p20 = scmp.ge.s32.totalorder %s19, 4
      %s29 = sphi 0, %s31
      %s32 = sphi 0, %s29
      %s33 = sphi 0, %s32
      %s49 = sphi 0, %s33
      %s53 = sphi 0, %s53
      %s55 = sphi 0, %s53
      %s56 = sphi 0, %s55
      %s70 = sphi 0, %s56
      %s74 = sphi 0, %s74
      %s76 = sphi 0, %s74
      %s77 = sphi 0, %s76
      %s91 = sphi 0, %s77
      %s95 = sphi 0, %s95
      %s97 = sphi 0, %s95
      %s98 = sphi 0, %s97
      %s112 = sphi 0, %s98
      %s116 = sphi 0, %s116
      %s118 = sphi 0, %s116
      %s119 = sphi 0, %s118
      %s133 = sphi 0, %s119
      %s137 = sphi 0, %s137
      %s139 = sphi 0, %s137
      %s140 = sphi 0, %s139
      %s154 = sphi 0, %s140
      %s158 = sphi 0, %s158
      %s160 = sphi 0, %s158
      %s161 = sphi 0, %s160
      %s175 = sphi 0, %s161
      %s179 = sphi 0, %s179
      %s181 = sphi 0, %s179
      %s182 = sphi 0, %s181
      %s196 = sphi 0, %s182
      %s202 = sphi 0, %s204
      %s205 = sphi 0, %s202
      %s206 = sphi 0, %s205
      %s222 = sphi 0, %s206
    $region4: #{tpu_custom_call.1} parent=1 // loop_header_branch
      %22 = sbr.rel (%p20) target = $region8
    $region5: #{tpu_custom_call.1} parent=1 // loop_body
      %s24 = ssub.s32 %s19, 1
      %s25 = ssub.s32 %s19, 2
      %s26 = sadd.s32 %s19, 1
      %s27 = ssub.s32 %s19, %s26
      %p28 = scmp.eq.s32.totalorder %s27, 0
      %s30 = sadd.s32 %s29, 1
      %s31 = scalar_select %p28, %s29, %s30
      %p34 = pneg %p28
      %p35 = scmp.eq.s32.totalorder %s19, 1
      %p36 = por %p34, %p35
      %p37 = scmp.ne.s32.totalorder %s29, %s32
      %p38 = scmp.eq.s32.totalorder %s19, 0
      %p39 = por %p37, %p38
      %p40 = scmp.ne.s32.totalorder %s29, %s32
      %p41 = scmp.eq.s32.totalorder %s24, 1
      %p42 = por %p40, %p41
      %p43 = scmp.ne.s32.totalorder %s32, %s33
      %p44 = scmp.eq.s32.totalorder %s24, 0
      %p45 = por %p43, %p44
      %p46 = scmp.ne.s32.totalorder %s32, %s33
      %p47 = scmp.eq.s32.totalorder %s25, 1
      %p48 = por %p46, %p47
      %p50 = scmp.ne.s32.totalorder %s33, %s49
      %p51 = scmp.eq.s32.totalorder %s25, 0
      %p52 = por %p50, %p51
      %s54 = sadd.s32 %s53, 1
      %p57 = scmp.eq.s32.totalorder %s19, 1
      %p58 = scmp.ne.s32.totalorder %s53, %s55
      %p59 = scmp.eq.s32.totalorder %s19, 0
      %p60 = por %p58, %p59
      %p61 = scmp.ne.s32.totalorder %s53, %s55
      %p62 = scmp.eq.s32.totalorder %s24, 1
      %p63 = por %p61, %p62
      %p64 = scmp.ne.s32.totalorder %s55, %s56
      %p65 = scmp.eq.s32.totalorder %s24, 0
      %p66 = por %p64, %p65
      %p67 = scmp.ne.s32.totalorder %s55, %s56
      %p68 = scmp.eq.s32.totalorder %s25, 1
      %p69 = por %p67, %p68
      %p71 = scmp.ne.s32.totalorder %s56, %s70
      %p72 = scmp.eq.s32.totalorder %s25, 0
      %p73 = por %p71, %p72
      %s75 = sadd.s32 %s74, 1
      %p78 = scmp.eq.s32.totalorder %s19, 1
      %p79 = scmp.ne.s32.totalorder %s74, %s76
      %p80 = scmp.eq.s32.totalorder %s19, 0
      %p81 = por %p79, %p80
      %p82 = scmp.ne.s32.totalorder %s74, %s76
      %p83 = scmp.eq.s32.totalorder %s24, 1
      %p84 = por %p82, %p83
      %p85 = scmp.ne.s32.totalorder %s76, %s77
      %p86 = scmp.eq.s32.totalorder %s24, 0
      %p87 = por %p85, %p86
      %p88 = scmp.ne.s32.totalorder %s76, %s77
      %p89 = scmp.eq.s32.totalorder %s25, 1
      %p90 = por %p88, %p89
      %p92 = scmp.ne.s32.totalorder %s77, %s91
      %p93 = scmp.eq.s32.totalorder %s25, 0
      %p94 = por %p92, %p93
      %s96 = sadd.s32 %s95, 1
      %p99 = scmp.eq.s32.totalorder %s19, 1
      %p100 = scmp.ne.s32.totalorder %s95, %s97
      %p101 = scmp.eq.s32.totalorder %s19, 0
      %p102 = por %p100, %p101
      %p103 = scmp.ne.s32.totalorder %s95, %s97
      %p104 = scmp.eq.s32.totalorder %s24, 1
      %p105 = por %p103, %p104
      %p106 = scmp.ne.s32.totalorder %s97, %s98
      %p107 = scmp.eq.s32.totalorder %s24, 0
      %p108 = por %p106, %p107
      %p109 = scmp.ne.s32.totalorder %s97, %s98
      %p110 = scmp.eq.s32.totalorder %s25, 1
      %p111 = por %p109, %p110
      %p113 = scmp.ne.s32.totalorder %s98, %s112
      %p114 = scmp.eq.s32.totalorder %s25, 0
      %p115 = por %p113, %p114
      %s117 = sadd.s32 %s116, 1
      %p120 = scmp.eq.s32.totalorder %s19, 1
      %p121 = scmp.ne.s32.totalorder %s116, %s118
      %p122 = scmp.eq.s32.totalorder %s19, 0
      %p123 = por %p121, %p122
      %p124 = scmp.ne.s32.totalorder %s116, %s118
      %p125 = scmp.eq.s32.totalorder %s24, 1
      %p126 = por %p124, %p125
      %p127 = scmp.ne.s32.totalorder %s118, %s119
      %p128 = scmp.eq.s32.totalorder %s24, 0
      %p129 = por %p127, %p128
      %p130 = scmp.ne.s32.totalorder %s118, %s119
      %p131 = scmp.eq.s32.totalorder %s25, 1
      %p132 = por %p130, %p131
      %p134 = scmp.ne.s32.totalorder %s119, %s133
      %p135 = scmp.eq.s32.totalorder %s25, 0
      %p136 = por %p134, %p135
      %s138 = sadd.s32 %s137, 1
      %p141 = scmp.eq.s32.totalorder %s19, 1
      %p142 = scmp.ne.s32.totalorder %s137, %s139
      %p143 = scmp.eq.s32.totalorder %s19, 0
      %p144 = por %p142, %p143
      %p145 = scmp.ne.s32.totalorder %s137, %s139
      %p146 = scmp.eq.s32.totalorder %s24, 1
      %p147 = por %p145, %p146
      %p148 = scmp.ne.s32.totalorder %s139, %s140
      %p149 = scmp.eq.s32.totalorder %s24, 0
      %p150 = por %p148, %p149
      %p151 = scmp.ne.s32.totalorder %s139, %s140
      %p152 = scmp.eq.s32.totalorder %s25, 1
      %p153 = por %p151, %p152
      %p155 = scmp.ne.s32.totalorder %s140, %s154
      %p156 = scmp.eq.s32.totalorder %s25, 0
      %p157 = por %p155, %p156
      %s159 = sadd.s32 %s158, 1
      %p162 = scmp.eq.s32.totalorder %s19, 1
      %p163 = scmp.ne.s32.totalorder %s158, %s160
      %p164 = scmp.eq.s32.totalorder %s19, 0
      %p165 = por %p163, %p164
      %p166 = scmp.ne.s32.totalorder %s158, %s160
      %p167 = scmp.eq.s32.totalorder %s24, 1
      %p168 = por %p166, %p167
      %p169 = scmp.ne.s32.totalorder %s160, %s161
      %p170 = scmp.eq.s32.totalorder %s24, 0
      %p171 = por %p169, %p170
      %p172 = scmp.ne.s32.totalorder %s160, %s161
      %p173 = scmp.eq.s32.totalorder %s25, 1
      %p174 = por %p172, %p173
      %p176 = scmp.ne.s32.totalorder %s161, %s175
      %p177 = scmp.eq.s32.totalorder %s25, 0
      %p178 = por %p176, %p177
      %s180 = sadd.s32 %s179, 1
      %p183 = scmp.eq.s32.totalorder %s19, 1
      %p184 = scmp.ne.s32.totalorder %s179, %s181
      %p185 = scmp.eq.s32.totalorder %s19, 0
      %p186 = por %p184, %p185
      %p187 = scmp.ne.s32.totalorder %s179, %s181
      %p188 = scmp.eq.s32.totalorder %s24, 1
      %p189 = por %p187, %p188
      %p190 = scmp.ne.s32.totalorder %s181, %s182
      %p191 = scmp.eq.s32.totalorder %s24, 0
      %p192 = por %p190, %p191
      %p193 = scmp.ne.s32.totalorder %s181, %s182
      %p194 = scmp.eq.s32.totalorder %s25, 1
      %p195 = por %p193, %p194
      %p197 = scmp.ne.s32.totalorder %s182, %s196
      %p198 = scmp.eq.s32.totalorder %s25, 0
      %p199 = por %p197, %p198
      %s200 = ssub.s32 %s19, %s26
      %p201 = scmp.eq.s32.totalorder %s200, 0
      %s203 = sadd.s32 %s202, 1
      %s204 = scalar_select %p201, %s202, %s203
      %p207 = pneg %p201
      %p208 = scmp.eq.s32.totalorder %s19, 1
      %p209 = por %p207, %p208
      %p210 = scmp.ne.s32.totalorder %s202, %s205
      %p211 = scmp.eq.s32.totalorder %s19, 0
      %p212 = por %p210, %p211
      %p213 = scmp.ne.s32.totalorder %s202, %s205
      %p214 = scmp.eq.s32.totalorder %s24, 1
      %p215 = por %p213, %p214
      %p216 = scmp.ne.s32.totalorder %s205, %s206
      %p217 = scmp.eq.s32.totalorder %s24, 0
      %p218 = por %p216, %p217
      %p219 = scmp.ne.s32.totalorder %s205, %s206
      %p220 = scmp.eq.s32.totalorder %s25, 1
      %p221 = por %p219, %p220
      %p223 = scmp.ne.s32.totalorder %s206, %s222
      %p224 = scmp.eq.s32.totalorder %s25, 0
      %p225 = por %p223, %p224
      %p226 = scmp.le.s32.totalorder 1, %s19
      %p227 = scmp.lt.s32.totalorder %s19, 3
      %p228 = pnand %p226, %p227
      %p229 = pneg %p228
      // Predicated region
      $region9: #{tpu_custom_call.1} parent=5 // pred_check
        _
      $region10: #{tpu_custom_call.1} parent=5 // pred_check_branch
        %231 = sbr.rel (%p228) target = $region12
      $region11: #{tpu_custom_call.1} parent=5 // pred_region
        %s232 = ssub.s32 %s19, 1
        // Predicated region
        $region13: #{tpu_custom_call.1} parent=11 // pred_check
          %p233 = pneg %p66
        $region14: #{tpu_custom_call.1} parent=11 // pred_check_branch
          %235 = sbr.rel (%p233) target = $region16
        $region15: #{tpu_custom_call.1} parent=11 // pred_region
          %s237 = ssub.s32 288, 288
          %238 = vsyncadd [#allocation3], %s237
          %s239 = sshll.u32 [#allocation2], 4
          %s240 = int_to_ptr.vmem [resolvable:$true] %s239
          %245 = dma.hbm_to_vmem [thread:$0]  %s1, 288, %s240, [#allocation3], 32, 32, 2
        $region16: #{tpu_custom_call.1} parent=11 // pred_fallthru
          _
        // Predicated region
        $region17: #{tpu_custom_call.1} parent=11 // pred_check
          %p246 = pneg %p87
        $region18: #{tpu_custom_call.1} parent=11 // pred_check_branch
          %248 = sbr.rel (%p246) target = $region20
        $region19: #{tpu_custom_call.1} parent=11 // pred_region
          _
        $region20: #{tpu_custom_call.1} parent=11 // pred_fallthru
          _
        // Predicated region
        $region21: #{tpu_custom_call.1} parent=11 // pred_check
          %p249 = pneg %p108
        $region22: #{tpu_custom_call.1} parent=11 // pred_check_branch
          %251 = sbr.rel (%p249) target = $region24
        $region23: #{tpu_custom_call.1} parent=11 // pred_region
          _
        $region24: #{tpu_custom_call.1} parent=11 // pred_fallthru
          _
        // Predicated region
        $region25: #{tpu_custom_call.1} parent=11 // pred_check
          %p252 = pneg %p129
        $region26: #{tpu_custom_call.1} parent=11 // pred_check_branch
          %254 = sbr.rel (%p252) target = $region28
        $region27: #{tpu_custom_call.1} parent=11 // pred_region
          %s256 = ssub.s32 1536, 1536
          %257 = vsyncadd [#allocation6], %s256
          %s258 = sshll.u32 [#allocation5], 4
          %s259 = int_to_ptr.vmem [resolvable:$true] %s258
          %264 = dma.hbm_to_vmem [thread:$0]  %s4, 1536, %s259, [#allocation6], 384, 384, 24
        $region28: #{tpu_custom_call.1} parent=11 // pred_fallthru
          _
        // Predicated region
        $region29: #{tpu_custom_call.1} parent=11 // pred_check
          %p265 = pneg %p150
        $region30: #{tpu_custom_call.1} parent=11 // pred_check_branch
          %267 = sbr.rel (%p265) target = $region32
        $region31: #{tpu_custom_call.1} parent=11 // pred_region
          _
        $region32: #{tpu_custom_call.1} parent=11 // pred_fallthru
          _
        // Predicated region
        $region33: #{tpu_custom_call.1} parent=11 // pred_check
          %p268 = pneg %p171
        $region34: #{tpu_custom_call.1} parent=11 // pred_check_branch
          %270 = sbr.rel (%p268) target = $region36
        $region35: #{tpu_custom_call.1} parent=11 // pred_region
          _
        $region36: #{tpu_custom_call.1} parent=11 // pred_fallthru
          _
        // Predicated region
        $region37: #{tpu_custom_call.1} parent=11 // pred_check
          %p271 = pneg %p192
        $region38: #{tpu_custom_call.1} parent=11 // pred_check_branch
          %273 = sbr.rel (%p271) target = $region40
        $region39: #{tpu_custom_call.1} parent=11 // pred_region
          _
        $region40: #{tpu_custom_call.1} parent=11 // pred_fallthru
          _
      $region12: #{tpu_custom_call.1} parent=5 // pred_fallthru
        _
      %p274 = scmp.lt.s32.totalorder %s19, 2
      // Predicated region
      $region41: #{tpu_custom_call.1} parent=5 // pred_check
        %p275 = pneg %p274
      $region42: #{tpu_custom_call.1} parent=5 // pred_check_branch
        %277 = sbr.rel (%p275) target = $region44
      $region43: #{tpu_custom_call.1} parent=5 // pred_region
        // Predicated region
        $region45: #{tpu_custom_call.1} parent=43 // pred_check
          %p278 = pneg %p39
        $region46: #{tpu_custom_call.1} parent=43 // pred_check_branch
          %280 = sbr.rel (%p278) target = $region48
        $region47: #{tpu_custom_call.1} parent=43 // pred_region
          %p281 = scmp.lt.s32.totalorder %s19, 1
          %s282 = scalar_select %p281, %s19, 1
          %s283 = smul.addr %s282, 2
          %s284 = smul.addr %s283, 8
          %s285 = scalar_lea.vmem %s0, %s284
        $region48: #{tpu_custom_call.1} parent=43 // pred_fallthru
          _
      $region44: #{tpu_custom_call.1} parent=5 // pred_fallthru
        _
      %p286 = scmp.le.s32.totalorder 1, %s19
      %p287 = scmp.lt.s32.totalorder %s19, 3
      %p288 = pnand %p286, %p287
      %p289 = pneg %p288
      // Predicated region
      $region49: #{tpu_custom_call.1} parent=5 // pred_check
        _
      $region50: #{tpu_custom_call.1} parent=5 // pred_check_branch
        %291 = sbr.rel (%p288) target = $region52
      $region51: #{tpu_custom_call.1} parent=5 // pred_region
        %s292 = ssub.s32 %s19, 1
        // Predicated region
        $region53: #{tpu_custom_call.1} parent=51 // pred_check
          %p293 = pneg %p66
        $region54: #{tpu_custom_call.1} parent=51 // pred_check_branch
          %295 = sbr.rel (%p293) target = $region56
        $region55: #{tpu_custom_call.1} parent=51 // pred_region
          %296 = dma.done [#allocation3], 288
        $region56: #{tpu_custom_call.1} parent=51 // pred_fallthru
          _
        // Predicated region
        $region57: #{tpu_custom_call.1} parent=51 // pred_check
          %p297 = pneg %p129
        $region58: #{tpu_custom_call.1} parent=51 // pred_check_branch
          %299 = sbr.rel (%p297) target = $region60
        $region59: #{tpu_custom_call.1} parent=51 // pred_region
          %300 = dma.done [#allocation6], 1536
        $region60: #{tpu_custom_call.1} parent=51 // pred_fallthru
          _
        %p301 = scmp.lt.s32.totalorder %s24, 1
        %s302 = scalar_select %p301, %s24, 1
        %s303 = smul.addr %s302, 2
        %s304 = smul.addr %s303, 8
        %s305 = scalar_lea.vmem %s0, %s304
        %p306 = pneg %p45
        %p307 = pneg %p42
        %p308 = pneg %p66
        %p309 = pneg %p63
        %p310 = pneg %p87
        %p311 = pneg %p84
        %p312 = pneg %p108
        %p313 = pneg %p105
        %p314 = pneg %p129
        %p315 = pneg %p126
        %p316 = pneg %p150
        %p317 = pneg %p147
        %p318 = pneg %p171
        %p319 = pneg %p168
        %p320 = pneg %p192
        %p321 = pneg %p189
        %p322 = pneg %p218
        %p323 = pneg %p215
        %s324 = sand.u32 %s205, 1
        %s325 = scalar_lea.sflag [#allocation4], %s324
        %s326 = sand.u32 %s205, 1
        %s327 = smul.addr %s326, 16
        %s328 = scalar_lea.vmem [#allocation7], %s327
        %p329 = scmp.lt.s32.totalorder %s24, 1
        %s330 = scalar_select %p329, %s24, 1
        %s331 = smul.addr %s330, 2
        %s332 = smul.addr %s331, 8
        %s333 = scalar_lea.vmem %s0, %s332
        %v334 = vld [vmem:[%s333] sm:$0xff]
        %v335 = vld [vmem:[%s333 + $0x8] sm:$0xff]
        %v336 = vsub.f32 %v334, 0.5
        %v337 = vsub.f32 %v335, 0.5
        %v338 = vmul.f32 %v336, 2.0
        %v339 = vmul.f32 %v337, 2.0
        %v340 = vld [vmem:[%s2] sm:$0xff]
        %v341 = vld [vmem:[%s2 + $0x8] sm:$0xff]
        %v342 = vld [vmem:[%s2 + $0x10] sm:$0xff]
        %v343 = vld [vmem:[%s2 + $0x18] sm:$0xff]
        %v344 = vld [vmem:[#allocation2] sm:$0x3]
        %345 = vrot.lane.b32.xlu0 %v338, 17
        %v346 = vpop.permute.xlu0 %345
        %347 = vrot.lane.b32.xlu0 %v339, 17
        %v348 = vpop.permute.xlu0 %347
        %v349 = vlaneseq
        %v350 = vand.u32 %v349, 127
        %vm351 = vcmp.lt.s32.totalorder %v350, 17
        %v352 = vsel %vm351, %v346, %v348
        %v353 = vsel %vm351, %v348, %v346
        %v355 = vlaneseq
        %v356 = vshrl.u32 %v355, 7
        %v357 = vsub.s32 0, %v356
        %v358 = vrot.slane %v344, %v357
        %v359 = vlaneseq
        %v360 = vshrl.u32 %v359, 7
        %v361 = vsub.s32 1, %v360
        %v362 = vrot.slane %v344, %v361
        %v365 = vmul.f32 %v358, %v353
        %v366 = vmul.f32 %v362, %v352
        %s367 = scalar_lea.vmem [#allocation2], 2
        %v368 = vld [vmem:[%s367] sm:$0x3]
        %369 = vrot.lane.b32.xlu0 %v338, 16
        %v370 = vpop.permute.xlu0 %369
        %371 = vrot.lane.b32.xlu0 %v339, 16
        %v372 = vpop.permute.xlu0 %371
        %vm373 = vcmp.lt.s32.totalorder %v350, 16
        %v374 = vsel %vm373, %v370, %v372
        %v375 = vsel %vm373, %v372, %v370
        %v377 = vlaneseq
        %v378 = vshrl.u32 %v377, 7
        %v379 = vsub.s32 0, %v378
        %v380 = vrot.slane %v368, %v379
        %v381 = vlaneseq
        %v382 = vshrl.u32 %v381, 7
        %v383 = vsub.s32 1, %v382
        %v384 = vrot.slane %v368, %v383
        %v387 = vmul.f32 %v380, %v375
        %v388 = vmul.f32 %v384, %v374
        %s389 = scalar_lea.vmem [#allocation2], 4
        %v390 = vld [vmem:[%s389] sm:$0x3]
        %391 = vrot.lane.b32.xlu0 %v338, 15
        %v392 = vpop.permute.xlu0 %391
        %393 = vrot.lane.b32.xlu0 %v339, 15
        %v394 = vpop.permute.xlu0 %393
        %vm395 = vcmp.lt.s32.totalorder %v350, 15
        %v396 = vsel %vm395, %v392, %v394
        %v397 = vsel %vm395, %v394, %v392
        %v399 = vlaneseq
        %v400 = vshrl.u32 %v399, 7
        %v401 = vsub.s32 0, %v400
        %v402 = vrot.slane %v390, %v401
        %v403 = vlaneseq
        %v404 = vshrl.u32 %v403, 7
        %v405 = vsub.s32 1, %v404
        %v406 = vrot.slane %v390, %v405
        %v409 = vmul.f32 %v402, %v397
        %v410 = vmul.f32 %v406, %v396
        %s411 = scalar_lea.vmem [#allocation2], 6
        %v412 = vld [vmem:[%s411] sm:$0x3]
        %413 = vrot.lane.b32.xlu0 %v338, 1
        %v414 = vpop.permute.xlu0 %413
        %415 = vrot.lane.b32.xlu0 %v339, 1
        %v416 = vpop.permute.xlu0 %415
        %vm417 = vcmp.lt.s32.totalorder %v350, 1
        %v418 = vsel %vm417, %v414, %v416
        %v419 = vsel %vm417, %v416, %v414
        %v421 = vlaneseq
        %v422 = vshrl.u32 %v421, 7
        %v423 = vsub.s32 0, %v422
        %v424 = vrot.slane %v412, %v423
        %v425 = vlaneseq
        %v426 = vshrl.u32 %v425, 7
        %v427 = vsub.s32 1, %v426
        %v428 = vrot.slane %v412, %v427
        %v431 = vmul.f32 %v424, %v419
        %v432 = vmul.f32 %v428, %v418
        %s433 = scalar_lea.vmem [#allocation2], 10
        %v434 = vld [vmem:[%s433] sm:$0x3]
        %435 = vrot.lane.b32.xlu0 %v338, 127
        %v436 = vpop.permute.xlu0 %435
        %437 = vrot.lane.b32.xlu0 %v339, 127
        %v438 = vpop.permute.xlu0 %437
        %vm439 = vcmp.lt.s32.totalorder %v350, 127
        %v440 = vsel %vm439, %v436, %v438
        %v441 = vsel %vm439, %v438, %v436
        %v443 = vlaneseq
        %v444 = vshrl.u32 %v443, 7
        %v445 = vsub.s32 0, %v444
        %v446 = vrot.slane %v434, %v445
        %v447 = vlaneseq
        %v448 = vshrl.u32 %v447, 7
        %v449 = vsub.s32 1, %v448
        %v450 = vrot.slane %v434, %v449
        %v453 = vmul.f32 %v446, %v440
        %v454 = vmul.f32 %v450, %v441
        %s455 = scalar_lea.vmem [#allocation2], 12
        %v456 = vld [vmem:[%s455] sm:$0x3]
        %457 = vrot.lane.b32.xlu0 %v338, 113
        %v458 = vpop.permute.xlu0 %457
        %459 = vrot.lane.b32.xlu0 %v339, 113
        %v460 = vpop.permute.xlu0 %459
        %vm461 = vcmp.lt.s32.totalorder %v350, 113
        %v462 = vsel %vm461, %v458, %v460
        %v463 = vsel %vm461, %v460, %v458
        %v465 = vlaneseq
        %v466 = vshrl.u32 %v465, 7
        %v467 = vsub.s32 0, %v466
        %v468 = vrot.slane %v456, %v467
        %v469 = vlaneseq
        %v470 = vshrl.u32 %v469, 7
        %v471 = vsub.s32 1, %v470
        %v472 = vrot.slane %v456, %v471
        %v475 = vmul.f32 %v468, %v462
        %v476 = vmul.f32 %v472, %v463
        %s477 = scalar_lea.vmem [#allocation2], 14
        %v478 = vld [vmem:[%s477] sm:$0x3]
        %479 = vrot.lane.b32.xlu0 %v338, 112
        %v480 = vpop.permute.xlu0 %479
        %481 = vrot.lane.b32.xlu0 %v339, 112
        %v482 = vpop.permute.xlu0 %481
        %vm483 = vcmp.lt.s32.totalorder %v350, 112
        %v484 = vsel %vm483, %v480, %v482
        %v485 = vsel %vm483, %v482, %v480
        %v487 = vlaneseq
        %v488 = vshrl.u32 %v487, 7
        %v489 = vsub.s32 0, %v488
        %v490 = vrot.slane %v478, %v489
        %v491 = vlaneseq
        %v492 = vshrl.u32 %v491, 7
        %v493 = vsub.s32 1, %v492
        %v494 = vrot.slane %v478, %v493
        %v497 = vmul.f32 %v490, %v484
        %v498 = vmul.f32 %v494, %v485
        %s499 = scalar_lea.vmem [#allocation2], 16
        %v500 = vld [vmem:[%s499] sm:$0x3]
        %501 = vrot.lane.b32.xlu0 %v338, 111
        %v502 = vpop.permute.xlu0 %501
        %503 = vrot.lane.b32.xlu0 %v339, 111
        %v504 = vpop.permute.xlu0 %503
        %vm505 = vcmp.lt.s32.totalorder %v350, 111
        %v506 = vsel %vm505, %v502, %v504
        %v507 = vsel %vm505, %v504, %v502
        %v509 = vlaneseq
        %v510 = vshrl.u32 %v509, 7
        %v511 = vsub.s32 0, %v510
        %v512 = vrot.slane %v500, %v511
        %v513 = vlaneseq
        %v514 = vshrl.u32 %v513, 7
        %v515 = vsub.s32 1, %v514
        %v516 = vrot.slane %v500, %v515
        %v519 = vmul.f32 %v512, %v506
        %v520 = vmul.f32 %v516, %v507
        %v521 = vld [vmem:[%s3] sm:$0xff]
        %v522 = vld [vmem:[%s3 + $0x8] sm:$0xff]
        %v523 = vld [vmem:[%s3 + $0x10] sm:$0xff]
        %v524 = vld [vmem:[%s3 + $0x18] sm:$0xff]
        %526 = vset.pattern.permute.xlu0 0
        %527 = vperm.xlu0 %526, %v521
        %v528 = vpop.permute.xlu0 %527
        %531 = vset.pattern.permute.xlu0 0
        %532 = vperm.xlu0 %531, %v522
        %v533 = vpop.permute.xlu0 %532
        %536 = vset.pattern.permute.xlu0 0
        %537 = vperm.xlu0 %536, %v523
        %v538 = vpop.permute.xlu0 %537
        %541 = vset.pattern.permute.xlu0 0
        %542 = vperm.xlu0 %541, %v524
        %v543 = vpop.permute.xlu0 %542
        %vm545 = vcmask 588800
        %v547 = vsel %vm545, %v340, 0
        %v550 = vsel %vm545, %v341, 0
        %v553 = vsel %vm545, %v342, 0
        %v556 = vsel %vm545, %v343, 0
        %558 = vmatprep.subr.mxu0 %v366
        %559 = vmatpush1.msra.mxu0 %v365
        %560 = vmatprep.subr.mxu0 %v388
        %561 = vmatpush1.msra.mxu0 %v387
        %562 = vmatprep.subr.mxu0 %v410
        %563 = vmatpush1.msra.mxu0 %v409
        %564 = vmatprep.subr.mxu0 %v432
        %565 = vmatpush1.msra.mxu0 %v431
        %566 = vmatprep.subr.mxu0 %v339
        %567 = vmatpush1.msra.mxu0 %v338
        %568 = vmatprep.subr.mxu0 %v454
        %569 = vmatpush1.msra.mxu0 %v453
        %570 = vmatprep.subr.mxu0 %v476
        %571 = vmatpush1.msra.mxu0 %v475
        %572 = vmatprep.subr.mxu0 %v498
        %573 = vmatpush1.msra.mxu0 %v497
        %574 = vmatprep.subr.mxu0 %v520
        %575 = vmatpush1.msra.mxu0 %v519
        %576 = vmatprep.subr.mxu0 0.0
        %577 = vmatpush1.msra.mxu0 0.0
        %578 = vmatprep.subr.mxu0 0.0
        %579 = vmatpush1.msra.mxu0 0.0
        %580 = vmatprep.subr.mxu0 0.0
        %581 = vmatpush1.msra.mxu0 0.0
        %582 = vmatprep.subr.mxu0 0.0
        %583 = vmatpush1.msra.mxu0 0.0
        %584 = vmatprep.subr.mxu0 0.0
        %585 = vmatpush1.msra.mxu0 0.0
        %586 = vmatprep.subr.mxu0 0.0
        %587 = vmatpush1.msra.mxu0 0.0
        %588 = vmatprep.subr.mxu0 0.0
        %589 = vmatpush1.msra.mxu0 0.0
        %590 = vmatprep.subr.mxu0 0.0
        %591 = vmatpush1.msra.mxu0 0.0
        %592 = vmatprep.subr.mxu0 0.0
        %593 = vmatpush1.msra.mxu0 0.0
        %594 = vmatprep.subr.mxu0 0.0
        %595 = vmatpush1.msra.mxu0 0.0
        %596 = vmatprep.subr.mxu0 0.0
        %597 = vmatpush1.msra.mxu0 0.0
        %598 = vmatprep.subr.mxu0 0.0
        %599 = vmatpush1.msra.mxu0 0.0
        %600 = vmatprep.subr.mxu0 0.0
        %601 = vmatpush1.msra.mxu0 0.0
        %602 = vmatprep.subr.mxu0 0.0
        %603 = vmatpush1.msra.mxu0 0.0
        %604 = vmatprep.subr.mxu0 0.0
        %605 = vmatpush1.msra.mxu0 0.0
        %606 = vmatprep.subr.mxu0 0.0
        %607 = vmatpush1.msra.mxu0 0.0
        %608 = vmatprep.subr.mxu0 0.0
        %609 = vmatpush1.msra.mxu0 0.0
        %610 = vmatprep.subr.mxu0 0.0
        %611 = vmatpush1.msra.mxu0 0.0
        %612 = vmatprep.subr.mxu0 0.0
        %613 = vmatpush1.msra.mxu0 0.0
        %614 = vmatprep.subr.mxu0 0.0
        %615 = vmatpush1.msra.mxu0 0.0
        %616 = vmatprep.subr.mxu0 0.0
        %617 = vmatpush1.msra.mxu0 0.0
        %618 = vmatprep.subr.mxu0 0.0
        %619 = vmatpush1.msra.mxu0 0.0
        %620 = vmatprep.subr.mxu0 0.0
        %621 = vmatpush1.msra.mxu0 0.0
        %622 = vmatprep.mubr.f32.mxu0 0.0
        %623 = vmatmul.mubr.f32.gmra.mrb[0].mxu0 %v547
        %v624 = vpop.f32.mrb[0].mxu0
        %v625 = vadd.f32 %v528, %v624
        %v626 = vpop.f32.mrb[0].mxu0
        %v627 = vadd.f32 %v528, %v626
        %628 = vmatprep.mubr.f32.mxu0 0.0
        %629 = vmatmul.mubr.f32.gmra.mrb[0].mxu0 %v550
        %v630 = vpop.f32.mrb[0].mxu0
        %v631 = vadd.f32 %v533, %v630
        %v632 = vpop.f32.mrb[0].mxu0
        %v633 = vadd.f32 %v533, %v632
        %634 = vmatprep.mubr.f32.mxu0 0.0
        %635 = vmatmul.mubr.f32.gmra.mrb[0].mxu0 %v553
        %v636 = vpop.f32.mrb[0].mxu0
        %v637 = vadd.f32 %v538, %v636
        %v638 = vpop.f32.mrb[0].mxu0
        %v639 = vadd.f32 %v538, %v638
        %640 = vmatprep.mubr.f32.mxu0 0.0
        %641 = vmatmul.mubr.f32.gmra.mrb[0].mxu0 %v556
        %v642 = vpop.f32.mrb[0].mxu0
        %v643 = vadd.f32 %v543, %v642
        %v644 = vpop.f32.mrb[0].mxu0
        %v645 = vadd.f32 %v543, %v644
        %646 = vdwg.mxu0
        %v647 = vmax.f32 %v625, 0.0
        %v648 = vmax.f32 %v627, 0.0
        %v649 = vmax.f32 %v631, 0.0
        %v650 = vmax.f32 %v633, 0.0
        %v651 = vmax.f32 %v637, 0.0
        %v652 = vmax.f32 %v639, 0.0
        %v653 = vmax.f32 %v643, 0.0
        %v654 = vmax.f32 %v645, 0.0
        %v655 = vld [vmem:[#allocation5] sm:$0xff]
        %v656 = vld [vmem:[#allocation5 + $0x8] sm:$0xff]
        %v657 = vld [vmem:[#allocation5 + $0x10] sm:$0xff]
        %v658 = vld [vmem:[#allocation5 + $0x18] sm:$0xff]
        %v659 = vld [vmem:[#allocation5 + $0x20] sm:$0xff]
        %v660 = vld [vmem:[#allocation5 + $0x28] sm:$0xff]
        %v661 = vld [vmem:[#allocation5 + $0x30] sm:$0xff]
        %v662 = vld [vmem:[#allocation5 + $0x38] sm:$0xff]
        %v663 = vld [vmem:[#allocation5 + $0x40] sm:$0xff]
        %v664 = vld [vmem:[#allocation5 + $0x48] sm:$0xff]
        %v665 = vld [vmem:[#allocation5 + $0x50] sm:$0xff]
        %v666 = vld [vmem:[#allocation5 + $0x58] sm:$0xff]
        %667 = vrot.lane.b32.xlu0 %v647, 17
        %v668 = vpop.permute.xlu0 %667
        %669 = vrot.lane.b32.xlu0 %v649, 17
        %v670 = vpop.permute.xlu0 %669
        %671 = vrot.lane.b32.xlu0 %v651, 17
        %v672 = vpop.permute.xlu0 %671
        %673 = vrot.lane.b32.xlu0 %v653, 17
        %v674 = vpop.permute.xlu0 %673
        %675 = vrot.lane.b32.xlu0 %v648, 17
        %v676 = vpop.permute.xlu0 %675
        %677 = vrot.lane.b32.xlu0 %v650, 17
        %v678 = vpop.permute.xlu0 %677
        %679 = vrot.lane.b32.xlu0 %v652, 17
        %v680 = vpop.permute.xlu0 %679
        %681 = vrot.lane.b32.xlu0 %v654, 17
        %v682 = vpop.permute.xlu0 %681
        %v683 = vsel %vm351, %v668, %v676
        %v684 = vsel %vm351, %v670, %v678
        %v685 = vsel %vm351, %v672, %v680
        %v686 = vsel %vm351, %v674, %v682
        %v687 = vsel %vm351, %v676, %v668
        %v688 = vsel %vm351, %v678, %v670
        %v689 = vsel %vm351, %v680, %v672
        %v690 = vsel %vm351, %v682, %v674
        %v691 = vmul.f32 %v358, %v687
        %v692 = vmul.f32 %v362, %v683
        %v693 = vmul.f32 %v358, %v688
        %v694 = vmul.f32 %v362, %v684
        %v695 = vmul.f32 %v358, %v689
        %v696 = vmul.f32 %v362, %v685
        %v697 = vmul.f32 %v358, %v690
        %v698 = vmul.f32 %v362, %v686
        %699 = vrot.lane.b32.xlu0 %v647, 16
        %v700 = vpop.permute.xlu0 %699
        %701 = vrot.lane.b32.xlu0 %v649, 16
        %v702 = vpop.permute.xlu0 %701
        %703 = vrot.lane.b32.xlu0 %v651, 16
        %v704 = vpop.permute.xlu0 %703
        %705 = vrot.lane.b32.xlu0 %v653, 16
        %v706 = vpop.permute.xlu0 %705
        %707 = vrot.lane.b32.xlu0 %v648, 16
        %v708 = vpop.permute.xlu0 %707
        %709 = vrot.lane.b32.xlu0 %v650, 16
        %v710 = vpop.permute.xlu0 %709
        %711 = vrot.lane.b32.xlu0 %v652, 16
        %v712 = vpop.permute.xlu0 %711
        %713 = vrot.lane.b32.xlu0 %v654, 16
        %v714 = vpop.permute.xlu0 %713
        %v715 = vsel %vm373, %v700, %v708
        %v716 = vsel %vm373, %v702, %v710
        %v717 = vsel %vm373, %v704, %v712
        %v718 = vsel %vm373, %v706, %v714
        %v719 = vsel %vm373, %v708, %v700
        %v720 = vsel %vm373, %v710, %v702
        %v721 = vsel %vm373, %v712, %v704
        %v722 = vsel %vm373, %v714, %v706
        %v723 = vmul.f32 %v380, %v719
        %v724 = vmul.f32 %v384, %v715
        %v725 = vmul.f32 %v380, %v720
        %v726 = vmul.f32 %v384, %v716
        %v727 = vmul.f32 %v380, %v721
        %v728 = vmul.f32 %v384, %v717
        %v729 = vmul.f32 %v380, %v722
        %v730 = vmul.f32 %v384, %v718
        %731 = vrot.lane.b32.xlu0 %v647, 15
        %v732 = vpop.permute.xlu0 %731
        %733 = vrot.lane.b32.xlu0 %v649, 15
        %v734 = vpop.permute.xlu0 %733
        %735 = vrot.lane.b32.xlu0 %v651, 15
        %v736 = vpop.permute.xlu0 %735
        %737 = vrot.lane.b32.xlu0 %v653, 15
        %v738 = vpop.permute.xlu0 %737
        %739 = vrot.lane.b32.xlu0 %v648, 15
        %v740 = vpop.permute.xlu0 %739
        %741 = vrot.lane.b32.xlu0 %v650, 15
        %v742 = vpop.permute.xlu0 %741
        %743 = vrot.lane.b32.xlu0 %v652, 15
        %v744 = vpop.permute.xlu0 %743
        %745 = vrot.lane.b32.xlu0 %v654, 15
        %v746 = vpop.permute.xlu0 %745
        %v747 = vsel %vm395, %v732, %v740
        %v748 = vsel %vm395, %v734, %v742
        %v749 = vsel %vm395, %v736, %v744
        %v750 = vsel %vm395, %v738, %v746
        %v751 = vsel %vm395, %v740, %v732
        %v752 = vsel %vm395, %v742, %v734
        %v753 = vsel %vm395, %v744, %v736
        %v754 = vsel %vm395, %v746, %v738
        %v755 = vmul.f32 %v402, %v751
        %v756 = vmul.f32 %v406, %v747
        %v757 = vmul.f32 %v402, %v752
        %v758 = vmul.f32 %v406, %v748
        %v759 = vmul.f32 %v402, %v753
        %v760 = vmul.f32 %v406, %v749
        %v761 = vmul.f32 %v402, %v754
        %v762 = vmul.f32 %v406, %v750
        %763 = vrot.lane.b32.xlu0 %v647, 1
        %v764 = vpop.permute.xlu0 %763
        %765 = vrot.lane.b32.xlu0 %v649, 1
        %v766 = vpop.permute.xlu0 %765
        %767 = vrot.lane.b32.xlu0 %v651, 1
        %v768 = vpop.permute.xlu0 %767
        %769 = vrot.lane.b32.xlu0 %v653, 1
        %v770 = vpop.permute.xlu0 %769
        %771 = vrot.lane.b32.xlu0 %v648, 1
        %v772 = vpop.permute.xlu0 %771
        %773 = vrot.lane.b32.xlu0 %v650, 1
        %v774 = vpop.permute.xlu0 %773
        %775 = vrot.lane.b32.xlu0 %v652, 1
        %v776 = vpop.permute.xlu0 %775
        %777 = vrot.lane.b32.xlu0 %v654, 1
        %v778 = vpop.permute.xlu0 %777
        %v779 = vsel %vm417, %v764, %v772
        %v780 = vsel %vm417, %v766, %v774
        %v781 = vsel %vm417, %v768, %v776
        %v782 = vsel %vm417, %v770, %v778
        %v783 = vsel %vm417, %v772, %v764
        %v784 = vsel %vm417, %v774, %v766
        %v785 = vsel %vm417, %v776, %v768
        %v786 = vsel %vm417, %v778, %v770
        %v787 = vmul.f32 %v424, %v783
        %v788 = vmul.f32 %v428, %v779
        %v789 = vmul.f32 %v424, %v784
        %v790 = vmul.f32 %v428, %v780
        %v791 = vmul.f32 %v424, %v785
        %v792 = vmul.f32 %v428, %v781
        %v793 = vmul.f32 %v424, %v786
        %v794 = vmul.f32 %v428, %v782
        %795 = vrot.lane.b32.xlu0 %v647, 127
        %v796 = vpop.permute.xlu0 %795
        %797 = vrot.lane.b32.xlu0 %v649, 127
        %v798 = vpop.permute.xlu0 %797
        %799 = vrot.lane.b32.xlu0 %v651, 127
        %v800 = vpop.permute.xlu0 %799
        %801 = vrot.lane.b32.xlu0 %v653, 127
        %v802 = vpop.permute.xlu0 %801
        %803 = vrot.lane.b32.xlu0 %v648, 127
        %v804 = vpop.permute.xlu0 %803
        %805 = vrot.lane.b32.xlu0 %v650, 127
        %v806 = vpop.permute.xlu0 %805
        %807 = vrot.lane.b32.xlu0 %v652, 127
        %v808 = vpop.permute.xlu0 %807
        %809 = vrot.lane.b32.xlu0 %v654, 127
        %v810 = vpop.permute.xlu0 %809
        %v811 = vsel %vm439, %v796, %v804
        %v812 = vsel %vm439, %v798, %v806
        %v813 = vsel %vm439, %v800, %v808
        %v814 = vsel %vm439, %v802, %v810
        %v815 = vsel %vm439, %v804, %v796
        %v816 = vsel %vm439, %v806, %v798
        %v817 = vsel %vm439, %v808, %v800
        %v818 = vsel %vm439, %v810, %v802
        %v819 = vmul.f32 %v446, %v811
        %v820 = vmul.f32 %v450, %v815
        %v821 = vmul.f32 %v446, %v812
        %v822 = vmul.f32 %v450, %v816
        %v823 = vmul.f32 %v446, %v813
        %v824 = vmul.f32 %v450, %v817
        %v825 = vmul.f32 %v446, %v814
        %v826 = vmul.f32 %v450, %v818
        %827 = vrot.lane.b32.xlu0 %v647, 113
        %v828 = vpop.permute.xlu0 %827
        %829 = vrot.lane.b32.xlu0 %v649, 113
        %v830 = vpop.permute.xlu0 %829
        %831 = vrot.lane.b32.xlu0 %v651, 113
        %v832 = vpop.permute.xlu0 %831
        %833 = vrot.lane.b32.xlu0 %v653, 113
        %v834 = vpop.permute.xlu0 %833
        %835 = vrot.lane.b32.xlu0 %v648, 113
        %v836 = vpop.permute.xlu0 %835
        %837 = vrot.lane.b32.xlu0 %v650, 113
        %v838 = vpop.permute.xlu0 %837
        %839 = vrot.lane.b32.xlu0 %v652, 113
        %v840 = vpop.permute.xlu0 %839
        %841 = vrot.lane.b32.xlu0 %v654, 113
        %v842 = vpop.permute.xlu0 %841
        %v843 = vsel %vm461, %v828, %v836
        %v844 = vsel %vm461, %v830, %v838
        %v845 = vsel %vm461, %v832, %v840
        %v846 = vsel %vm461, %v834, %v842
        %v847 = vsel %vm461, %v836, %v828
        %v848 = vsel %vm461, %v838, %v830
        %v849 = vsel %vm461, %v840, %v832
        %v850 = vsel %vm461, %v842, %v834
        %v851 = vmul.f32 %v468, %v843
        %v852 = vmul.f32 %v472, %v847
        %v853 = vmul.f32 %v468, %v844
        %v854 = vmul.f32 %v472, %v848
        %v855 = vmul.f32 %v468, %v845
        %v856 = vmul.f32 %v472, %v849
        %v857 = vmul.f32 %v468, %v846
        %v858 = vmul.f32 %v472, %v850
        %859 = vrot.lane.b32.xlu0 %v647, 112
        %v860 = vpop.permute.xlu0 %859
        %861 = vrot.lane.b32.xlu0 %v649, 112
        %v862 = vpop.permute.xlu0 %861
        %863 = vrot.lane.b32.xlu0 %v651, 112
        %v864 = vpop.permute.xlu0 %863
        %865 = vrot.lane.b32.xlu0 %v653, 112
        %v866 = vpop.permute.xlu0 %865
        %867 = vrot.lane.b32.xlu0 %v648, 112
        %v868 = vpop.permute.xlu0 %867
        %869 = vrot.lane.b32.xlu0 %v650, 112
        %v870 = vpop.permute.xlu0 %869
        %871 = vrot.lane.b32.xlu0 %v652, 112
        %v872 = vpop.permute.xlu0 %871
        %873 = vrot.lane.b32.xlu0 %v654, 112
        %v874 = vpop.permute.xlu0 %873
        %v875 = vsel %vm483, %v860, %v868
        %v876 = vsel %vm483, %v862, %v870
        %v877 = vsel %vm483, %v864, %v872
        %v878 = vsel %vm483, %v866, %v874
        %v879 = vsel %vm483, %v868, %v860
        %v880 = vsel %vm483, %v870, %v862
        %v881 = vsel %vm483, %v872, %v864
        %v882 = vsel %vm483, %v874, %v866
        %v883 = vmul.f32 %v490, %v875
        %v884 = vmul.f32 %v494, %v879
        %v885 = vmul.f32 %v490, %v876
        %v886 = vmul.f32 %v494, %v880
        %v887 = vmul.f32 %v490, %v877
        %v888 = vmul.f32 %v494, %v881
        %v889 = vmul.f32 %v490, %v878
        %v890 = vmul.f32 %v494, %v882
        %891 = vrot.lane.b32.xlu0 %v647, 111
        %v892 = vpop.permute.xlu0 %891
        %893 = vrot.lane.b32.xlu0 %v649, 111
        %v894 = vpop.permute.xlu0 %893
        %895 = vrot.lane.b32.xlu0 %v651, 111
        %v896 = vpop.permute.xlu0 %895
        %897 = vrot.lane.b32.xlu0 %v653, 111
        %v898 = vpop.permute.xlu0 %897
        %899 = vrot.lane.b32.xlu0 %v648, 111
        %v900 = vpop.permute.xlu0 %899
        %901 = vrot.lane.b32.xlu0 %v650, 111
        %v902 = vpop.permute.xlu0 %901
        %903 = vrot.lane.b32.xlu0 %v652, 111
        %v904 = vpop.permute.xlu0 %903
        %905 = vrot.lane.b32.xlu0 %v654, 111
        %v906 = vpop.permute.xlu0 %905
        %v907 = vsel %vm505, %v892, %v900
        %v908 = vsel %vm505, %v894, %v902
        %v909 = vsel %vm505, %v896, %v904
        %v910 = vsel %vm505, %v898, %v906
        %v911 = vsel %vm505, %v900, %v892
        %v912 = vsel %vm505, %v902, %v894
        %v913 = vsel %vm505, %v904, %v896
        %v914 = vsel %vm505, %v906, %v898
        %v915 = vmul.f32 %v512, %v907
        %v916 = vmul.f32 %v516, %v911
        %v917 = vmul.f32 %v512, %v908
        %v918 = vmul.f32 %v516, %v912
        %v919 = vmul.f32 %v512, %v909
        %v920 = vmul.f32 %v516, %v913
        %v921 = vmul.f32 %v512, %v910
        %v922 = vmul.f32 %v516, %v914
        %v923 = vld [vmem:[%s5] sm:$0xff]
        %v924 = vld [vmem:[%s5 + $0x8] sm:$0xff]
        %v925 = vld [vmem:[%s5 + $0x10] sm:$0xff]
        %v926 = vld [vmem:[%s5 + $0x18] sm:$0xff]
        %928 = vset.pattern.permute.xlu0 0
        %929 = vperm.xlu0 %928, %v923
        %v930 = vpop.permute.xlu0 %929
        %933 = vset.pattern.permute.xlu0 0
        %934 = vperm.xlu0 %933, %v924
        %v935 = vpop.permute.xlu0 %934
        %938 = vset.pattern.permute.xlu0 0
        %939 = vperm.xlu0 %938, %v925
        %v940 = vpop.permute.xlu0 %939
        %943 = vset.pattern.permute.xlu0 0
        %944 = vperm.xlu0 %943, %v926
        %v945 = vpop.permute.xlu0 %944
        %vm947 = vcmask 261120
        %v949 = vsel %vm947, %v657, 0
        %v952 = vsel %vm947, %v660, 0
        %v955 = vsel %vm947, %v663, 0
        %v958 = vsel %vm947, %v666, 0
        %960 = vmatprep.subr.mxu0 %v692
        %961 = vmatpush1.msra.mxu0 %v691
        %962 = vmatprep.subr.mxu0 %v694
        %963 = vmatpush1.msra.mxu0 %v693
        %964 = vmatprep.subr.mxu0 %v696
        %965 = vmatpush1.msra.mxu0 %v695
        %966 = vmatprep.subr.mxu0 %v698
        %967 = vmatpush1.msra.mxu0 %v697
        %968 = vmatprep.subr.mxu0 %v724
        %969 = vmatpush1.msra.mxu0 %v723
        %970 = vmatprep.subr.mxu0 %v726
        %971 = vmatpush1.msra.mxu0 %v725
        %972 = vmatprep.subr.mxu0 %v728
        %973 = vmatpush1.msra.mxu0 %v727
        %974 = vmatprep.subr.mxu0 %v730
        %975 = vmatpush1.msra.mxu0 %v729
        %976 = vmatprep.subr.mxu0 %v756
        %977 = vmatpush1.msra.mxu0 %v755
        %978 = vmatprep.subr.mxu0 %v758
        %979 = vmatpush1.msra.mxu0 %v757
        %980 = vmatprep.subr.mxu0 %v760
        %981 = vmatpush1.msra.mxu0 %v759
        %982 = vmatprep.subr.mxu0 %v762
        %983 = vmatpush1.msra.mxu0 %v761
        %984 = vmatprep.subr.mxu0 %v788
        %985 = vmatpush1.msra.mxu0 %v787
        %986 = vmatprep.subr.mxu0 %v790
        %987 = vmatpush1.msra.mxu0 %v789
        %988 = vmatprep.subr.mxu0 %v792
        %989 = vmatpush1.msra.mxu0 %v791
        %990 = vmatprep.subr.mxu0 %v794
        %991 = vmatpush1.msra.mxu0 %v793
        %992 = vmatprep.subr.mxu0 %v648
        %993 = vmatpush1.msra.mxu0 %v647
        %994 = vmatprep.subr.mxu0 %v650
        %995 = vmatpush1.msra.mxu0 %v649
        %996 = vmatprep.subr.mxu0 %v652
        %997 = vmatpush1.msra.mxu0 %v651
        %998 = vmatprep.subr.mxu0 %v654
        %999 = vmatpush1.msra.mxu0 %v653
        %1000 = vmatprep.subr.mxu0 %v820
        %1001 = vmatpush1.msra.mxu0 %v819
        %1002 = vmatprep.subr.mxu0 %v822
        %1003 = vmatpush1.msra.mxu0 %v821
        %1004 = vmatprep.subr.mxu0 %v824
        %1005 = vmatpush1.msra.mxu0 %v823
        %1006 = vmatprep.subr.mxu0 %v826
        %1007 = vmatpush1.msra.mxu0 %v825
        %1008 = vmatprep.subr.mxu0 %v852
        %1009 = vmatpush1.msra.mxu0 %v851
        %1010 = vmatprep.subr.mxu0 %v854
        %1011 = vmatpush1.msra.mxu0 %v853
        %1012 = vmatprep.subr.mxu0 %v856
        %1013 = vmatpush1.msra.mxu0 %v855
        %1014 = vmatprep.subr.mxu0 %v858
        %1015 = vmatpush1.msra.mxu0 %v857
        %1016 = vmatprep.subr.mxu0 %v884
        %1017 = vmatpush1.msra.mxu0 %v883
        %1018 = vmatprep.subr.mxu0 %v886
        %1019 = vmatpush1.msra.mxu0 %v885
        %1020 = vmatprep.subr.mxu0 %v888
        %1021 = vmatpush1.msra.mxu0 %v887
        %1022 = vmatprep.subr.mxu0 %v890
        %1023 = vmatpush1.msra.mxu0 %v889
        %1024 = vmatprep.mubr.f32.mxu0 %v656
        %1025 = vmatmul.mubr.f32.gmra.mrb[0].mxu0 %v655
        %v1026 = vpop.f32.mrb[0].mxu0
        %v1027 = vadd.f32 %v930, %v1026
        %v1028 = vpop.f32.mrb[0].mxu0
        %v1029 = vadd.f32 %v930, %v1028
        %1030 = vmatprep.mubr.f32.mxu0 %v659
        %1031 = vmatmul.mubr.f32.gmra.mrb[0].mxu0 %v658
        %v1032 = vpop.f32.mrb[0].mxu0
        %v1033 = vadd.f32 %v935, %v1032
        %v1034 = vpop.f32.mrb[0].mxu0
        %v1035 = vadd.f32 %v935, %v1034
        %1036 = vmatprep.mubr.f32.mxu0 %v662
        %1037 = vmatmul.mubr.f32.gmra.mrb[0].mxu0 %v661
        %v1038 = vpop.f32.mrb[0].mxu0
        %v1039 = vadd.f32 %v940, %v1038
        %v1040 = vpop.f32.mrb[0].mxu0
        %v1041 = vadd.f32 %v940, %v1040
        %1042 = vmatprep.mubr.f32.mxu0 %v665
        %1043 = vmatmul.mubr.f32.gmra.mrb[0].mxu0 %v664
        %v1044 = vpop.f32.mrb[0].mxu0
        %v1045 = vadd.f32 %v945, %v1044
        %v1046 = vpop.f32.mrb[0].mxu0
        %v1047 = vadd.f32 %v945, %v1046
        %1048 = vdwg.mxu0
        %1049 = vmatprep.subr.mxu0 %v916
        %1050 = vmatpush1.msra.mxu0 %v915
        %1051 = vmatprep.subr.mxu0 %v918
        %1052 = vmatpush1.msra.mxu0 %v917
        %1053 = vmatprep.subr.mxu0 %v920
        %1054 = vmatpush1.msra.mxu0 %v919
        %1055 = vmatprep.subr.mxu0 %v922
        %1056 = vmatpush1.msra.mxu0 %v921
        %1057 = vmatprep.subr.mxu0 0.0
        %1058 = vmatpush1.msra.mxu0 0.0
        %1059 = vmatprep.subr.mxu0 0.0
        %1060 = vmatpush1.msra.mxu0 0.0
        %1061 = vmatprep.subr.mxu0 0.0
        %1062 = vmatpush1.msra.mxu0 0.0
        %1063 = vmatprep.subr.mxu0 0.0
        %1064 = vmatpush1.msra.mxu0 0.0
        %1065 = vmatprep.subr.mxu0 0.0
        %1066 = vmatpush1.msra.mxu0 0.0
        %1067 = vmatprep.subr.mxu0 0.0
        %1068 = vmatpush1.msra.mxu0 0.0
        %1069 = vmatprep.subr.mxu0 0.0
        %1070 = vmatpush1.msra.mxu0 0.0
        %1071 = vmatprep.subr.mxu0 0.0
        %1072 = vmatpush1.msra.mxu0 0.0
        %1073 = vmatprep.subr.mxu0 0.0
        %1074 = vmatpush1.msra.mxu0 0.0
        %1075 = vmatprep.subr.mxu0 0.0
        %1076 = vmatpush1.msra.mxu0 0.0
        %1077 = vmatprep.subr.mxu0 0.0
        %1078 = vmatpush1.msra.mxu0 0.0
        %1079 = vmatprep.subr.mxu0 0.0
        %1080 = vmatpush1.msra.mxu0 0.0
        %1081 = vmatprep.subr.mxu0 0.0
        %1082 = vmatpush1.msra.mxu0 0.0
        %1083 = vmatprep.subr.mxu0 0.0
        %1084 = vmatpush1.msra.mxu0 0.0
        %1085 = vmatprep.subr.mxu0 0.0
        %1086 = vmatpush1.msra.mxu0 0.0
        %1087 = vmatprep.subr.mxu0 0.0
        %1088 = vmatpush1.msra.mxu0 0.0
        %1089 = vmatprep.subr.mxu0 0.0
        %1090 = vmatpush1.msra.mxu0 0.0
        %1091 = vmatprep.subr.mxu0 0.0
        %1092 = vmatpush1.msra.mxu0 0.0
        %1093 = vmatprep.subr.mxu0 0.0
        %1094 = vmatpush1.msra.mxu0 0.0
        %1095 = vmatprep.subr.mxu0 0.0
        %1096 = vmatpush1.msra.mxu0 0.0
        %1097 = vmatprep.subr.mxu0 0.0
        %1098 = vmatpush1.msra.mxu0 0.0
        %1099 = vmatprep.subr.mxu0 0.0
        %1100 = vmatpush1.msra.mxu0 0.0
        %1101 = vmatprep.subr.mxu0 0.0
        %1102 = vmatpush1.msra.mxu0 0.0
        %1103 = vmatprep.subr.mxu0 0.0
        %1104 = vmatpush1.msra.mxu0 0.0
        %1105 = vmatprep.subr.mxu0 0.0
        %1106 = vmatpush1.msra.mxu0 0.0
        %1107 = vmatprep.subr.mxu0 0.0
        %1108 = vmatpush1.msra.mxu0 0.0
        %1109 = vmatprep.subr.mxu0 0.0
        %1110 = vmatpush1.msra.mxu0 0.0
        %1111 = vmatprep.subr.mxu0 0.0
        %1112 = vmatpush1.msra.mxu0 0.0
        %1113 = vmatprep.mubr.f32.mxu0 0.0
        %1114 = vmatmul.mubr.f32.gmra.mrb[0].mxu0 %v949
        %v1115 = vpop.f32.mrb[0].mxu0
        %v1116 = vadd.f32 %v1027, %v1115
        %v1117 = vpop.f32.mrb[0].mxu0
        %v1118 = vadd.f32 %v1029, %v1117
        %1119 = vmatprep.mubr.f32.mxu0 0.0
        %1120 = vmatmul.mubr.f32.gmra.mrb[0].mxu0 %v952
        %v1121 = vpop.f32.mrb[0].mxu0
        %v1122 = vadd.f32 %v1033, %v1121
        %v1123 = vpop.f32.mrb[0].mxu0
        %v1124 = vadd.f32 %v1035, %v1123
        %1125 = vmatprep.mubr.f32.mxu0 0.0
        %1126 = vmatmul.mubr.f32.gmra.mrb[0].mxu0 %v955
        %v1127 = vpop.f32.mrb[0].mxu0
        %v1128 = vadd.f32 %v1039, %v1127
        %v1129 = vpop.f32.mrb[0].mxu0
        %v1130 = vadd.f32 %v1041, %v1129
        %1131 = vmatprep.mubr.f32.mxu0 0.0
        %1132 = vmatmul.mubr.f32.gmra.mrb[0].mxu0 %v958
        %v1133 = vpop.f32.mrb[0].mxu0
        %v1134 = vadd.f32 %v1045, %v1133
        %v1135 = vpop.f32.mrb[0].mxu0
        %v1136 = vadd.f32 %v1047, %v1135
        %1137 = vdwg.mxu0
        %v1138 = vmax.f32 %v1116, 0.0
        %v1139 = vmax.f32 %v1118, 0.0
        %v1140 = vmax.f32 %v1122, 0.0
        %v1141 = vmax.f32 %v1124, 0.0
        %v1142 = vmax.f32 %v1128, 0.0
        %v1143 = vmax.f32 %v1130, 0.0
        %v1144 = vmax.f32 %v1134, 0.0
        %v1145 = vmax.f32 %v1136, 0.0
        %v1146 = vld [vmem:[%s6] sm:$0xff]
        %v1147 = vld [vmem:[%s7] sm:$0xff]
        %1149 = vset.pattern.permute.xlu0 0
        %1150 = vperm.xlu0 %1149, %v1147
        %v1151 = vpop.permute.xlu0 %1150
        %v1154 = vsel %vm947, %v1146, 0
        %1156 = vmatprep.subr.mxu0 %v1139
        %1157 = vmatpush1.msra.mxu0 %v1138
        %1158 = vmatprep.subr.mxu0 %v1141
        %1159 = vmatpush1.msra.mxu0 %v1140
        %1160 = vmatprep.subr.mxu0 %v1143
        %1161 = vmatpush1.msra.mxu0 %v1142
        %1162 = vmatprep.subr.mxu0 %v1145
        %1163 = vmatpush1.msra.mxu0 %v1144
        %1164 = vmatprep.subr.mxu0 0.0
        %1165 = vmatpush1.msra.mxu0 0.0
        %1166 = vmatprep.subr.mxu0 0.0
        %1167 = vmatpush1.msra.mxu0 0.0
        %1168 = vmatprep.subr.mxu0 0.0
        %1169 = vmatpush1.msra.mxu0 0.0
        %1170 = vmatprep.subr.mxu0 0.0
        %1171 = vmatpush1.msra.mxu0 0.0
        %1172 = vmatprep.subr.mxu0 0.0
        %1173 = vmatpush1.msra.mxu0 0.0
        %1174 = vmatprep.subr.mxu0 0.0
        %1175 = vmatpush1.msra.mxu0 0.0
        %1176 = vmatprep.subr.mxu0 0.0
        %1177 = vmatpush1.msra.mxu0 0.0
        %1178 = vmatprep.subr.mxu0 0.0
        %1179 = vmatpush1.msra.mxu0 0.0
        %1180 = vmatprep.subr.mxu0 0.0
        %1181 = vmatpush1.msra.mxu0 0.0
        %1182 = vmatprep.subr.mxu0 0.0
        %1183 = vmatpush1.msra.mxu0 0.0
        %1184 = vmatprep.subr.mxu0 0.0
        %1185 = vmatpush1.msra.mxu0 0.0
        %1186 = vmatprep.subr.mxu0 0.0
        %1187 = vmatpush1.msra.mxu0 0.0
        %1188 = vmatprep.subr.mxu0 0.0
        %1189 = vmatpush1.msra.mxu0 0.0
        %1190 = vmatprep.subr.mxu0 0.0
        %1191 = vmatpush1.msra.mxu0 0.0
        %1192 = vmatprep.subr.mxu0 0.0
        %1193 = vmatpush1.msra.mxu0 0.0
        %1194 = vmatprep.subr.mxu0 0.0
        %1195 = vmatpush1.msra.mxu0 0.0
        %1196 = vmatprep.subr.mxu0 0.0
        %1197 = vmatpush1.msra.mxu0 0.0
        %1198 = vmatprep.subr.mxu0 0.0
        %1199 = vmatpush1.msra.mxu0 0.0
        %1200 = vmatprep.subr.mxu0 0.0
        %1201 = vmatpush1.msra.mxu0 0.0
        %1202 = vmatprep.subr.mxu0 0.0
        %1203 = vmatpush1.msra.mxu0 0.0
        %1204 = vmatprep.subr.mxu0 0.0
        %1205 = vmatpush1.msra.mxu0 0.0
        %1206 = vmatprep.subr.mxu0 0.0
        %1207 = vmatpush1.msra.mxu0 0.0
        %1208 = vmatprep.subr.mxu0 0.0
        %1209 = vmatpush1.msra.mxu0 0.0
        %1210 = vmatprep.subr.mxu0 0.0
        %1211 = vmatpush1.msra.mxu0 0.0
        %1212 = vmatprep.subr.mxu0 0.0
        %1213 = vmatpush1.msra.mxu0 0.0
        %1214 = vmatprep.subr.mxu0 0.0
        %1215 = vmatpush1.msra.mxu0 0.0
        %1216 = vmatprep.subr.mxu0 0.0
        %1217 = vmatpush1.msra.mxu0 0.0
        %1218 = vmatprep.subr.mxu0 0.0
        %1219 = vmatpush1.msra.mxu0 0.0
        %1220 = vmatprep.mubr.f32.mxu0 0.0
        %1221 = vmatmul.mubr.f32.gmra.mrb[0].mxu0 %v1154
        %v1222 = vpop.f32.mrb[0].mxu0
        %v1223 = vadd.f32 %v1151, %v1222
        %v1224 = vpop.f32.mrb[0].mxu0
        %v1225 = vadd.f32 %v1151, %v1224
        %1226 = vdwg.mxu0
        %1227 = vst [vmem:[%s328] sm:$0xff] %v1223
        %1228 = vst [vmem:[%s328 + $0x8] sm:$0xff] %v1225
        %s1229 = sand.u32 %s205, 1
        %s1230 = scalar_lea.sflag [#allocation4], %s1229
        %s1231 = sand.u32 %s205, 1
        %s1232 = smul.addr %s1231, 16
        %s1233 = scalar_lea.vmem [#allocation7], %s1232
        // Predicated region
        $region61: #{tpu_custom_call.1} parent=51 // pred_check
          %p1234 = pneg %p215
        $region62: #{tpu_custom_call.1} parent=51 // pred_check_branch
          %1236 = sbr.rel (%p1234) target = $region64
        $region63: #{tpu_custom_call.1} parent=51 // pred_region
          %s1238 = ssub.s32 256, 256
          %1239 = vsyncadd %s1230, %s1238
          %s1240 = smul.addr %s24, 2
          %s1241 = smul.addr %s1240, 128
          %s1242 = scalar_lea.hbm %s8, %s1241
          %s1244 = sshll.u32 %s1233, 4
          %s1245 = int_to_ptr.vmem [resolvable:$true] %s1244
          %1247 = dma.vmem_to_hbm [thread:$0]  %s1245, 256, %s1242, %s1230
        $region64: #{tpu_custom_call.1} parent=51 // pred_fallthru
          _
      $region52: #{tpu_custom_call.1} parent=5 // pred_fallthru
        _
      %p1248 = scmp.le.s32.totalorder 2, %s19
      // Predicated region
      $region65: #{tpu_custom_call.1} parent=5 // pred_check
        %p1249 = pneg %p1248
      $region66: #{tpu_custom_call.1} parent=5 // pred_check_branch
        %1251 = sbr.rel (%p1249) target = $region68
      $region67: #{tpu_custom_call.1} parent=5 // pred_region
        %s1252 = ssub.s32 %s19, 2
        // Predicated region
        $region69: #{tpu_custom_call.1} parent=67 // pred_check
          %p1253 = pneg %p221
        $region70: #{tpu_custom_call.1} parent=67 // pred_check_branch
          %1255 = sbr.rel (%p1253) target = $region72
        $region71: #{tpu_custom_call.1} parent=67 // pred_region
          %s1256 = sand.u32 %s206, 1
          %s1257 = scalar_lea.sflag [#allocation4], %s1256
          %s1258 = sand.u32 %s206, 1
          %s1259 = smul.addr %s1258, 16
          %s1260 = scalar_lea.vmem [#allocation7], %s1259
          %1261 = dma.done %s1257, 256
        $region72: #{tpu_custom_call.1} parent=67 // pred_fallthru
          _
      $region68: #{tpu_custom_call.1} parent=5 // pred_fallthru
        _
    $region6: #{tpu_custom_call.1} parent=1 // loop_footer
      %s23 = sadd.s32 1, %s19
    $region7: #{tpu_custom_call.1} parent=1 // loop_footer_branch
      %18 = sbr.rel target = $region3
    $region8: #{tpu_custom_call.1} parent=1 // loop_exit
      _
    %1262 = vsyncpa [#allocation3], 1
    %s1263 = scalar_lea.sflag [#allocation3], 1
    %1264 = vsyncpa %s1263, 1
    %1265 = vsyncpa [#allocation6], 1
    %1266 = vsyncpa [#allocation4], 1
    %s1267 = scalar_lea.sflag [#allocation4], 1
    %1268 = vsyncpa %s1267, 1

</llo_original>
